<compile_context>
chip_gen: v6e
topology: v6e:2x2x1
jax: 0.10.0
libtpu: 0.0.40
codegen_flags: <defaults>
</compile_context>

<pallas_src>
import functools

import jax
import jax.numpy as jnp
from jax.experimental import pallas as pl
from jax.experimental.pallas import tpu as pltpu

_LANES = 128


# ----------------------------------------------------------------------------
# One-time probe of pltpu.roll's rotation direction (cached per process).
# ----------------------------------------------------------------------------
@functools.lru_cache(maxsize=None)
def _roll_convention():
    """+1 if pltpu.roll matches jnp.roll (out[l] = in[l - shift]),
       -1 if it is the opposite rotation (out[l] = in[l + shift]),
        0 if unrecognized (packed path disabled, fallback kernel used)."""

    def kern(o_ref):
        lane = jax.lax.broadcasted_iota(jnp.float32, (8, _LANES), 1)
        o_ref[...] = pltpu.roll(lane, shift=1, axis=1)

    try:
        r = pl.pallas_call(
            kern, out_shape=jax.ShapeDtypeStruct((8, _LANES), jnp.float32))()
        v = int(jax.device_get(r)[0, 0])
    except Exception:  # pragma: no cover - safety net only
        return 0
    if v == _LANES - 1:
        return 1
    if v == 1:
        return -1
    return 0


# ----------------------------------------------------------------------------
# Packed kernel: 128 // seg logical rows per 128-lane vector row.
# ----------------------------------------------------------------------------
def _make_packed_kernel(seg, conv):
    nseg = _LANES // seg   # seg divides 128 -> seg is a power of two

    def segroll(v, t, lane_in_seg):
        """Segment-cyclic lane rotation by t (0 < t < seg)."""
        if nseg == 1:
            return pltpu.roll(v, shift=t % _LANES, axis=1)
        a = pltpu.roll(v, shift=t, axis=1)
        b = pltpu.roll(v, shift=(t - seg) % _LANES, axis=1)
        if conv == 1:          # out[l] = in[l - shift]
            keep_a = lane_in_seg >= t
        else:                  # out[l] = in[l + shift]
            keep_a = lane_in_seg < (seg - t)
        return jnp.where(keep_a, a, b)

    # doubling shifts for segmented (width-seg) butterfly reductions
    bfly = []
    t = 1
    while t < seg:
        bfly.append(t)
        t *= 2

    def kernel(x_ref, o_ref):
        x = x_ref[...].astype(jnp.float32)                       # (TM, 128)

        if nseg > 1:
            lane = jax.lax.broadcasted_iota(jnp.int32, x.shape, 1)
            lane_in_seg = lane & (seg - 1)
        else:
            lane_in_seg = None

        # --- segmented max (per logical row) for the stabilizing shift -------
        m = x
        for t in bfly:
            m = jnp.maximum(m, segroll(m, t, lane_in_seg))
        z = x - m                                                # row max -> 0

        # --- pairwise term: D_i = sum_j min(z_i - z_j, 0) --------------------
        d = jnp.zeros_like(z)
        for s in range(1, seg):
            zs = segroll(z, s, lane_in_seg)
            d = d + jnp.minimum(z - zs, 0.0)

        cond = d > -1.0
        k = jnp.where(cond, 1.0, 0.0)                            # support indicator
        s1 = jnp.where(cond, z, 0.0)                             # support values

        # --- segmented sums: support size k and sum of support values --------
        for t in bfly:
            k = k + segroll(k, t, lane_in_seg)
            s1 = s1 + segroll(s1, t, lane_in_seg)

        tau = (s1 - 1.0) / k                                     # k >= 1 always
        o_ref[...] = jnp.maximum(z - tau, 0.0).astype(o_ref.dtype)

    return kernel


# ----------------------------------------------------------------------------
# Fallback kernel for widths that do not divide 128 (runs at N/128 lane density).
# ----------------------------------------------------------------------------
def _rowloop_kernel(x_ref, o_ref):
    # TODO(synk): for large N (>=128) switch the unrolled pairwise loop to a
    # lax.fori_loop / tau-bisection formulation to bound unroll size & vreg
    # live ranges.
    x = x_ref[...].astype(jnp.float32)                           # (TM, N)
    n = x.shape[-1]
    z = x - jnp.max(x, axis=-1, keepdims=True)
    d = jnp.zeros_like(z)
    for j in range(n):
        d = d + jnp.minimum(z - z[:, j:j + 1], 0.0)
    cond = d > -1.0
    k = jnp.sum(jnp.where(cond, 1.0, 0.0), axis=-1, keepdims=True)
    s1 = jnp.sum(jnp.where(cond, z, 0.0), axis=-1, keepdims=True)
    tau = (s1 - 1.0) / k
    o_ref[...] = jnp.maximum(z - tau, 0.0).astype(o_ref.dtype)


def _round_up(v, m):
    return -(-v // m) * m


@functools.partial(jax.jit, static_argnames=("conv", "max_tile_rows"))
def _sparsemax_2d(x2, conv, max_tile_rows):
    """Sparsemax along axis -1 of a (rows, n) array."""
    rows, n = x2.shape
    dtype = x2.dtype
    use_packed = (conv != 0) and (n <= _LANES) and (_LANES % n == 0)

    if use_packed:
        pack = _LANES // n
        prows = -(-rows // pack)
        lrows = prows * pack
        if lrows != rows:                      # zero pad rows are discarded below
            x2 = jnp.pad(x2, ((0, lrows - rows), (0, 0)))
        xp = x2.reshape(prows, _LANES)         # free row-major lane packing
        lane_width = _LANES
        kernel = _make_packed_kernel(n, conv)
    else:
        prows = rows
        xp = x2
        lane_width = n
        kernel = _rowloop_kernel

    # Row tiling: biggest tile that fits comfortably in VMEM, but keep >= 2 grid
    # steps when possible so both v7x TensorCores are used ("parallel" axis).
    n_tiles = max(2, -(-prows // max_tile_rows))
    tm = min(max_tile_rows, _round_up(-(-prows // n_tiles), 8))
    grid = -(-prows // tm)
    prows_pad = grid * tm
    if prows_pad != prows:
        xp = jnp.pad(xp, ((0, prows_pad - prows), (0, 0)))

    out = pl.pallas_call(
        kernel,
        out_shape=jax.ShapeDtypeStruct((prows_pad, lane_width), dtype),
        grid=(grid,),
        in_specs=[pl.BlockSpec((tm, lane_width), lambda i: (i, 0))],
        out_specs=pl.BlockSpec((tm, lane_width), lambda i: (i, 0)),
        compiler_params=pltpu.CompilerParams(
            dimension_semantics=("parallel",)),
    )(xp)

    if use_packed:
        out = out.reshape(prows_pad * pack, n)
    return out[:rows]


def sparsemax(x, max_tile_rows=1024):
    """Sparsemax along the last axis; matches the PyTorch Sparsemax.forward."""
    orig_shape = x.shape
    n = orig_shape[-1]
    x2 = x.reshape(-1, n)
    need_probe = (n < _LANES) and (_LANES % n == 0)
    conv = _roll_convention() if need_probe else 1
    out = _sparsemax_2d(x2, conv=conv, max_tile_rows=max_tile_rows)
    return out.reshape(orig_shape)


def _sparsemax_ref(x):
    """Pure-JAX reference mirroring the PyTorch (sorted) algorithm."""
    orig_shape = x.shape
    n = orig_shape[-1]
    x2 = x.reshape(-1, n).astype(jnp.float32)
    x2 = x2 - jnp.max(x2, axis=1, keepdims=True)
    zs = -jnp.sort(-x2, axis=1)                                  # descending
    rng = jnp.arange(1, n + 1, dtype=jnp.float32)[None, :]
    bound = 1.0 + rng * zs
    csum = jnp.cumsum(zs, axis=1)
    is_gt = (bound > csum).astype(jnp.float32)
    k = jnp.max(is_gt * rng, axis=1, keepdims=True)
    taus = (jnp.sum(is_gt * zs, axis=1, keepdims=True) - 1.0) / k
    return jnp.maximum(x2 - taus, 0.0).reshape(orig_shape)


if __name__ == "__main__":
    key = jax.random.PRNGKey(0)
    k0, k1 = jax.random.split(key)

    # main shape: batch=2, channels=4, seq=16, logits=32 ; sparsemax over dim=-1
    x = jax.random.normal(k0, (2, 4, 16, 32), dtype=jnp.float32) * 3.0
    out = jax.block_until_ready(sparsemax(x))
    ref = jax.block_until_ready(_sparsemax_ref(x))
    assert out.shape == x.shape and out.dtype == x.dtype
    # tolerance: sums are re-associated vs. the sorted reference; support-boundary
    # near-ties may flip with O(1e-4) effect on the affected (near-zero) outputs.
    assert jnp.allclose(out, ref, atol=1e-4, rtol=1e-4), "mismatch vs reference"
    assert jnp.allclose(jnp.sum(out, axis=-1), 1.0, atol=1e-4)
    assert bool(jnp.all(out >= 0.0))

    # secondary shape: width that does not divide 128 exercises the fallback path
    x_fb = jax.random.normal(k1, (4, 8, 24), dtype=jnp.float32) * 2.0
    out_fb = jax.block_until_ready(sparsemax(x_fb))
    ref_fb = jax.block_until_ready(_sparsemax_ref(x_fb))
    assert jnp.allclose(out_fb, ref_fb, atol=1e-4, rtol=1e-4)
    assert jnp.allclose(jnp.sum(out_fb, axis=-1), 1.0, atol=1e-4)

    print("KERNEL_OK")
</pallas_src>

<mosaic_0001>
module attributes {stable_mosaic.version = 11 : i64} {
  func.func @_rowloop_kernel(%arg0: i32, %arg1: memref<64x32xf32, #tpu.memory_space<vmem>>, %arg2: memref<64x32xf32, #tpu.memory_space<vmem>>) attributes {dimension_semantics = [#tpu.dimension_semantics<parallel>], iteration_bounds = array<i64: 2>, scalar_prefetch = 0 : i64, scratch_operands = 0 : i64, tpu.core_type = #tpu.core_type<tc>, window_params = [{transform_indices = @transform_0, window_bounds = array<i64: 64, 32>}, {transform_indices = @transform_1, window_bounds = array<i64: 64, 32>}]} {
    %c0 = arith.constant 0 : index
    %c0_0 = arith.constant 0 : index
    %0 = vector.load %arg1[%c0, %c0_0] : memref<64x32xf32, #tpu.memory_space<vmem>>, vector<64x32xf32>
    %cst = arith.constant dense<0xFF800000> : vector<64xf32>
    %1 = vector.multi_reduction <maximumf>, %0, %cst [1] : vector<64x32xf32> to vector<64xf32>
    %2 = vector.shape_cast %1 : vector<64xf32> to vector<64x1xf32>
    %3 = vector.broadcast %2 : vector<64x1xf32> to vector<64x32xf32>
    %4 = arith.subf %0, %3 : vector<64x32xf32>
    %cst_1 = arith.constant 0.000000e+00 : f32
    %5 = vector.broadcast %cst_1 : f32 to vector<64x32xf32>
    %6 = vector.extract_strided_slice %4 {offsets = [0, 0], sizes = [64, 1], strides = [1, 1]} : vector<64x32xf32> to vector<64x1xf32>
    %7 = vector.broadcast %6 : vector<64x1xf32> to vector<64x32xf32>
    %8 = arith.subf %4, %7 : vector<64x32xf32>
    %cst_2 = arith.constant 0.000000e+00 : f32
    %9 = vector.broadcast %cst_2 : f32 to vector<64x32xf32>
    %10 = arith.minimumf %8, %9 : vector<64x32xf32>
    %11 = arith.addf %5, %10 : vector<64x32xf32>
    %12 = vector.extract_strided_slice %4 {offsets = [0, 1], sizes = [64, 1], strides = [1, 1]} : vector<64x32xf32> to vector<64x1xf32>
    %13 = vector.broadcast %12 : vector<64x1xf32> to vector<64x32xf32>
    %14 = arith.subf %4, %13 : vector<64x32xf32>
    %cst_3 = arith.constant 0.000000e+00 : f32
    %15 = vector.broadcast %cst_3 : f32 to vector<64x32xf32>
    %16 = arith.minimumf %14, %15 : vector<64x32xf32>
    %17 = arith.addf %11, %16 : vector<64x32xf32>
    %18 = vector.extract_strided_slice %4 {offsets = [0, 2], sizes = [64, 1], strides = [1, 1]} : vector<64x32xf32> to vector<64x1xf32>
    %19 = vector.broadcast %18 : vector<64x1xf32> to vector<64x32xf32>
    %20 = arith.subf %4, %19 : vector<64x32xf32>
    %cst_4 = arith.constant 0.000000e+00 : f32
    %21 = vector.broadcast %cst_4 : f32 to vector<64x32xf32>
    %22 = arith.minimumf %20, %21 : vector<64x32xf32>
    %23 = arith.addf %17, %22 : vector<64x32xf32>
    %24 = vector.extract_strided_slice %4 {offsets = [0, 3], sizes = [64, 1], strides = [1, 1]} : vector<64x32xf32> to vector<64x1xf32>
    %25 = vector.broadcast %24 : vector<64x1xf32> to vector<64x32xf32>
    %26 = arith.subf %4, %25 : vector<64x32xf32>
    %cst_5 = arith.constant 0.000000e+00 : f32
    %27 = vector.broadcast %cst_5 : f32 to vector<64x32xf32>
    %28 = arith.minimumf %26, %27 : vector<64x32xf32>
    %29 = arith.addf %23, %28 : vector<64x32xf32>
    %30 = vector.extract_strided_slice %4 {offsets = [0, 4], sizes = [64, 1], strides = [1, 1]} : vector<64x32xf32> to vector<64x1xf32>
    %31 = vector.broadcast %30 : vector<64x1xf32> to vector<64x32xf32>
    %32 = arith.subf %4, %31 : vector<64x32xf32>
    %cst_6 = arith.constant 0.000000e+00 : f32
    %33 = vector.broadcast %cst_6 : f32 to vector<64x32xf32>
    %34 = arith.minimumf %32, %33 : vector<64x32xf32>
    %35 = arith.addf %29, %34 : vector<64x32xf32>
    %36 = vector.extract_strided_slice %4 {offsets = [0, 5], sizes = [64, 1], strides = [1, 1]} : vector<64x32xf32> to vector<64x1xf32>
    %37 = vector.broadcast %36 : vector<64x1xf32> to vector<64x32xf32>
    %38 = arith.subf %4, %37 : vector<64x32xf32>
    %cst_7 = arith.constant 0.000000e+00 : f32
    %39 = vector.broadcast %cst_7 : f32 to vector<64x32xf32>
    %40 = arith.minimumf %38, %39 : vector<64x32xf32>
    %41 = arith.addf %35, %40 : vector<64x32xf32>
    %42 = vector.extract_strided_slice %4 {offsets = [0, 6], sizes = [64, 1], strides = [1, 1]} : vector<64x32xf32> to vector<64x1xf32>
    %43 = vector.broadcast %42 : vector<64x1xf32> to vector<64x32xf32>
    %44 = arith.subf %4, %43 : vector<64x32xf32>
    %cst_8 = arith.constant 0.000000e+00 : f32
    %45 = vector.broadcast %cst_8 : f32 to vector<64x32xf32>
    %46 = arith.minimumf %44, %45 : vector<64x32xf32>
    %47 = arith.addf %41, %46 : vector<64x32xf32>
    %48 = vector.extract_strided_slice %4 {offsets = [0, 7], sizes = [64, 1], strides = [1, 1]} : vector<64x32xf32> to vector<64x1xf32>
    %49 = vector.broadcast %48 : vector<64x1xf32> to vector<64x32xf32>
    %50 = arith.subf %4, %49 : vector<64x32xf32>
    %cst_9 = arith.constant 0.000000e+00 : f32
    %51 = vector.broadcast %cst_9 : f32 to vector<64x32xf32>
    %52 = arith.minimumf %50, %51 : vector<64x32xf32>
    %53 = arith.addf %47, %52 : vector<64x32xf32>
    %54 = vector.extract_strided_slice %4 {offsets = [0, 8], sizes = [64, 1], strides = [1, 1]} : vector<64x32xf32> to vector<64x1xf32>
    %55 = vector.broadcast %54 : vector<64x1xf32> to vector<64x32xf32>
    %56 = arith.subf %4, %55 : vector<64x32xf32>
    %cst_10 = arith.constant 0.000000e+00 : f32
    %57 = vector.broadcast %cst_10 : f32 to vector<64x32xf32>
    %58 = arith.minimumf %56, %57 : vector<64x32xf32>
    %59 = arith.addf %53, %58 : vector<64x32xf32>
    %60 = vector.extract_strided_slice %4 {offsets = [0, 9], sizes = [64, 1], strides = [1, 1]} : vector<64x32xf32> to vector<64x1xf32>
    %61 = vector.broadcast %60 : vector<64x1xf32> to vector<64x32xf32>
    %62 = arith.subf %4, %61 : vector<64x32xf32>
    %cst_11 = arith.constant 0.000000e+00 : f32
    %63 = vector.broadcast %cst_11 : f32 to vector<64x32xf32>
    %64 = arith.minimumf %62, %63 : vector<64x32xf32>
    %65 = arith.addf %59, %64 : vector<64x32xf32>
    %66 = vector.extract_strided_slice %4 {offsets = [0, 10], sizes = [64, 1], strides = [1, 1]} : vector<64x32xf32> to vector<64x1xf32>
    %67 = vector.broadcast %66 : vector<64x1xf32> to vector<64x32xf32>
    %68 = arith.subf %4, %67 : vector<64x32xf32>
    %cst_12 = arith.constant 0.000000e+00 : f32
    %69 = vector.broadcast %cst_12 : f32 to vector<64x32xf32>
    %70 = arith.minimumf %68, %69 : vector<64x32xf32>
    %71 = arith.addf %65, %70 : vector<64x32xf32>
    %72 = vector.extract_strided_slice %4 {offsets = [0, 11], sizes = [64, 1], strides = [1, 1]} : vector<64x32xf32> to vector<64x1xf32>
    %73 = vector.broadcast %72 : vector<64x1xf32> to vector<64x32xf32>
    %74 = arith.subf %4, %73 : vector<64x32xf32>
    %cst_13 = arith.constant 0.000000e+00 : f32
    %75 = vector.broadcast %cst_13 : f32 to vector<64x32xf32>
    %76 = arith.minimumf %74, %75 : vector<64x32xf32>
    %77 = arith.addf %71, %76 : vector<64x32xf32>
    %78 = vector.extract_strided_slice %4 {offsets = [0, 12], sizes = [64, 1], strides = [1, 1]} : vector<64x32xf32> to vector<64x1xf32>
    %79 = vector.broadcast %78 : vector<64x1xf32> to vector<64x32xf32>
    %80 = arith.subf %4, %79 : vector<64x32xf32>
    %cst_14 = arith.constant 0.000000e+00 : f32
    %81 = vector.broadcast %cst_14 : f32 to vector<64x32xf32>
    %82 = arith.minimumf %80, %81 : vector<64x32xf32>
    %83 = arith.addf %77, %82 : vector<64x32xf32>
    %84 = vector.extract_strided_slice %4 {offsets = [0, 13], sizes = [64, 1], strides = [1, 1]} : vector<64x32xf32> to vector<64x1xf32>
    %85 = vector.broadcast %84 : vector<64x1xf32> to vector<64x32xf32>
    %86 = arith.subf %4, %85 : vector<64x32xf32>
    %cst_15 = arith.constant 0.000000e+00 : f32
    %87 = vector.broadcast %cst_15 : f32 to vector<64x32xf32>
    %88 = arith.minimumf %86, %87 : vector<64x32xf32>
    %89 = arith.addf %83, %88 : vector<64x32xf32>
    %90 = vector.extract_strided_slice %4 {offsets = [0, 14], sizes = [64, 1], strides = [1, 1]} : vector<64x32xf32> to vector<64x1xf32>
    %91 = vector.broadcast %90 : vector<64x1xf32> to vector<64x32xf32>
    %92 = arith.subf %4, %91 : vector<64x32xf32>
    %cst_16 = arith.constant 0.000000e+00 : f32
    %93 = vector.broadcast %cst_16 : f32 to vector<64x32xf32>
    %94 = arith.minimumf %92, %93 : vector<64x32xf32>
    %95 = arith.addf %89, %94 : vector<64x32xf32>
    %96 = vector.extract_strided_slice %4 {offsets = [0, 15], sizes = [64, 1], strides = [1, 1]} : vector<64x32xf32> to vector<64x1xf32>
    %97 = vector.broadcast %96 : vector<64x1xf32> to vector<64x32xf32>
    %98 = arith.subf %4, %97 : vector<64x32xf32>
    %cst_17 = arith.constant 0.000000e+00 : f32
    %99 = vector.broadcast %cst_17 : f32 to vector<64x32xf32>
    %100 = arith.minimumf %98, %99 : vector<64x32xf32>
    %101 = arith.addf %95, %100 : vector<64x32xf32>
    %102 = vector.extract_strided_slice %4 {offsets = [0, 16], sizes = [64, 1], strides = [1, 1]} : vector<64x32xf32> to vector<64x1xf32>
    %103 = vector.broadcast %102 : vector<64x1xf32> to vector<64x32xf32>
    %104 = arith.subf %4, %103 : vector<64x32xf32>
    %cst_18 = arith.constant 0.000000e+00 : f32
    %105 = vector.broadcast %cst_18 : f32 to vector<64x32xf32>
    %106 = arith.minimumf %104, %105 : vector<64x32xf32>
    %107 = arith.addf %101, %106 : vector<64x32xf32>
    %108 = vector.extract_strided_slice %4 {offsets = [0, 17], sizes = [64, 1], strides = [1, 1]} : vector<64x32xf32> to vector<64x1xf32>
    %109 = vector.broadcast %108 : vector<64x1xf32> to vector<64x32xf32>
    %110 = arith.subf %4, %109 : vector<64x32xf32>
    %cst_19 = arith.constant 0.000000e+00 : f32
    %111 = vector.broadcast %cst_19 : f32 to vector<64x32xf32>
    %112 = arith.minimumf %110, %111 : vector<64x32xf32>
    %113 = arith.addf %107, %112 : vector<64x32xf32>
    %114 = vector.extract_strided_slice %4 {offsets = [0, 18], sizes = [64, 1], strides = [1, 1]} : vector<64x32xf32> to vector<64x1xf32>
    %115 = vector.broadcast %114 : vector<64x1xf32> to vector<64x32xf32>
    %116 = arith.subf %4, %115 : vector<64x32xf32>
    %cst_20 = arith.constant 0.000000e+00 : f32
    %117 = vector.broadcast %cst_20 : f32 to vector<64x32xf32>
    %118 = arith.minimumf %116, %117 : vector<64x32xf32>
    %119 = arith.addf %113, %118 : vector<64x32xf32>
    %120 = vector.extract_strided_slice %4 {offsets = [0, 19], sizes = [64, 1], strides = [1, 1]} : vector<64x32xf32> to vector<64x1xf32>
    %121 = vector.broadcast %120 : vector<64x1xf32> to vector<64x32xf32>
    %122 = arith.subf %4, %121 : vector<64x32xf32>
    %cst_21 = arith.constant 0.000000e+00 : f32
    %123 = vector.broadcast %cst_21 : f32 to vector<64x32xf32>
    %124 = arith.minimumf %122, %123 : vector<64x32xf32>
    %125 = arith.addf %119, %124 : vector<64x32xf32>
    %126 = vector.extract_strided_slice %4 {offsets = [0, 20], sizes = [64, 1], strides = [1, 1]} : vector<64x32xf32> to vector<64x1xf32>
    %127 = vector.broadcast %126 : vector<64x1xf32> to vector<64x32xf32>
    %128 = arith.subf %4, %127 : vector<64x32xf32>
    %cst_22 = arith.constant 0.000000e+00 : f32
    %129 = vector.broadcast %cst_22 : f32 to vector<64x32xf32>
    %130 = arith.minimumf %128, %129 : vector<64x32xf32>
    %131 = arith.addf %125, %130 : vector<64x32xf32>
    %132 = vector.extract_strided_slice %4 {offsets = [0, 21], sizes = [64, 1], strides = [1, 1]} : vector<64x32xf32> to vector<64x1xf32>
    %133 = vector.broadcast %132 : vector<64x1xf32> to vector<64x32xf32>
    %134 = arith.subf %4, %133 : vector<64x32xf32>
    %cst_23 = arith.constant 0.000000e+00 : f32
    %135 = vector.broadcast %cst_23 : f32 to vector<64x32xf32>
    %136 = arith.minimumf %134, %135 : vector<64x32xf32>
    %137 = arith.addf %131, %136 : vector<64x32xf32>
    %138 = vector.extract_strided_slice %4 {offsets = [0, 22], sizes = [64, 1], strides = [1, 1]} : vector<64x32xf32> to vector<64x1xf32>
    %139 = vector.broadcast %138 : vector<64x1xf32> to vector<64x32xf32>
    %140 = arith.subf %4, %139 : vector<64x32xf32>
    %cst_24 = arith.constant 0.000000e+00 : f32
    %141 = vector.broadcast %cst_24 : f32 to vector<64x32xf32>
    %142 = arith.minimumf %140, %141 : vector<64x32xf32>
    %143 = arith.addf %137, %142 : vector<64x32xf32>
    %144 = vector.extract_strided_slice %4 {offsets = [0, 23], sizes = [64, 1], strides = [1, 1]} : vector<64x32xf32> to vector<64x1xf32>
    %145 = vector.broadcast %144 : vector<64x1xf32> to vector<64x32xf32>
    %146 = arith.subf %4, %145 : vector<64x32xf32>
    %cst_25 = arith.constant 0.000000e+00 : f32
    %147 = vector.broadcast %cst_25 : f32 to vector<64x32xf32>
    %148 = arith.minimumf %146, %147 : vector<64x32xf32>
    %149 = arith.addf %143, %148 : vector<64x32xf32>
    %150 = vector.extract_strided_slice %4 {offsets = [0, 24], sizes = [64, 1], strides = [1, 1]} : vector<64x32xf32> to vector<64x1xf32>
    %151 = vector.broadcast %150 : vector<64x1xf32> to vector<64x32xf32>
    %152 = arith.subf %4, %151 : vector<64x32xf32>
    %cst_26 = arith.constant 0.000000e+00 : f32
    %153 = vector.broadcast %cst_26 : f32 to vector<64x32xf32>
    %154 = arith.minimumf %152, %153 : vector<64x32xf32>
    %155 = arith.addf %149, %154 : vector<64x32xf32>
    %156 = vector.extract_strided_slice %4 {offsets = [0, 25], sizes = [64, 1], strides = [1, 1]} : vector<64x32xf32> to vector<64x1xf32>
    %157 = vector.broadcast %156 : vector<64x1xf32> to vector<64x32xf32>
    %158 = arith.subf %4, %157 : vector<64x32xf32>
    %cst_27 = arith.constant 0.000000e+00 : f32
    %159 = vector.broadcast %cst_27 : f32 to vector<64x32xf32>
    %160 = arith.minimumf %158, %159 : vector<64x32xf32>
    %161 = arith.addf %155, %160 : vector<64x32xf32>
    %162 = vector.extract_strided_slice %4 {offsets = [0, 26], sizes = [64, 1], strides = [1, 1]} : vector<64x32xf32> to vector<64x1xf32>
    %163 = vector.broadcast %162 : vector<64x1xf32> to vector<64x32xf32>
    %164 = arith.subf %4, %163 : vector<64x32xf32>
    %cst_28 = arith.constant 0.000000e+00 : f32
    %165 = vector.broadcast %cst_28 : f32 to vector<64x32xf32>
    %166 = arith.minimumf %164, %165 : vector<64x32xf32>
    %167 = arith.addf %161, %166 : vector<64x32xf32>
    %168 = vector.extract_strided_slice %4 {offsets = [0, 27], sizes = [64, 1], strides = [1, 1]} : vector<64x32xf32> to vector<64x1xf32>
    %169 = vector.broadcast %168 : vector<64x1xf32> to vector<64x32xf32>
    %170 = arith.subf %4, %169 : vector<64x32xf32>
    %cst_29 = arith.constant 0.000000e+00 : f32
    %171 = vector.broadcast %cst_29 : f32 to vector<64x32xf32>
    %172 = arith.minimumf %170, %171 : vector<64x32xf32>
    %173 = arith.addf %167, %172 : vector<64x32xf32>
    %174 = vector.extract_strided_slice %4 {offsets = [0, 28], sizes = [64, 1], strides = [1, 1]} : vector<64x32xf32> to vector<64x1xf32>
    %175 = vector.broadcast %174 : vector<64x1xf32> to vector<64x32xf32>
    %176 = arith.subf %4, %175 : vector<64x32xf32>
    %cst_30 = arith.constant 0.000000e+00 : f32
    %177 = vector.broadcast %cst_30 : f32 to vector<64x32xf32>
    %178 = arith.minimumf %176, %177 : vector<64x32xf32>
    %179 = arith.addf %173, %178 : vector<64x32xf32>
    %180 = vector.extract_strided_slice %4 {offsets = [0, 29], sizes = [64, 1], strides = [1, 1]} : vector<64x32xf32> to vector<64x1xf32>
    %181 = vector.broadcast %180 : vector<64x1xf32> to vector<64x32xf32>
    %182 = arith.subf %4, %181 : vector<64x32xf32>
    %cst_31 = arith.constant 0.000000e+00 : f32
    %183 = vector.broadcast %cst_31 : f32 to vector<64x32xf32>
    %184 = arith.minimumf %182, %183 : vector<64x32xf32>
    %185 = arith.addf %179, %184 : vector<64x32xf32>
    %186 = vector.extract_strided_slice %4 {offsets = [0, 30], sizes = [64, 1], strides = [1, 1]} : vector<64x32xf32> to vector<64x1xf32>
    %187 = vector.broadcast %186 : vector<64x1xf32> to vector<64x32xf32>
    %188 = arith.subf %4, %187 : vector<64x32xf32>
    %cst_32 = arith.constant 0.000000e+00 : f32
    %189 = vector.broadcast %cst_32 : f32 to vector<64x32xf32>
    %190 = arith.minimumf %188, %189 : vector<64x32xf32>
    %191 = arith.addf %185, %190 : vector<64x32xf32>
    %192 = vector.extract_strided_slice %4 {offsets = [0, 31], sizes = [64, 1], strides = [1, 1]} : vector<64x32xf32> to vector<64x1xf32>
    %193 = vector.broadcast %192 : vector<64x1xf32> to vector<64x32xf32>
    %194 = arith.subf %4, %193 : vector<64x32xf32>
    %cst_33 = arith.constant 0.000000e+00 : f32
    %195 = vector.broadcast %cst_33 : f32 to vector<64x32xf32>
    %196 = arith.minimumf %194, %195 : vector<64x32xf32>
    %197 = arith.addf %191, %196 : vector<64x32xf32>
    %cst_34 = arith.constant -1.000000e+00 : f32
    %198 = vector.broadcast %cst_34 : f32 to vector<64x32xf32>
    %199 = arith.cmpf ogt, %197, %198 : vector<64x32xf32>
    %cst_35 = arith.constant 1.000000e+00 : f32
    %cst_36 = arith.constant 0.000000e+00 : f32
    %200 = vector.broadcast %cst_35 : f32 to vector<64x32xf32>
    %201 = vector.broadcast %cst_36 : f32 to vector<64x32xf32>
    %202 = arith.select %199, %200, %201 : vector<64x32xi1>, vector<64x32xf32>
    %cst_37 = arith.constant dense<0.000000e+00> : vector<64xf32>
    %203 = vector.multi_reduction <add>, %202, %cst_37 [1] : vector<64x32xf32> to vector<64xf32>
    %204 = vector.shape_cast %203 : vector<64xf32> to vector<64x1xf32>
    %cst_38 = arith.constant 0.000000e+00 : f32
    %205 = vector.broadcast %cst_38 : f32 to vector<64x32xf32>
    %206 = arith.select %199, %4, %205 : vector<64x32xi1>, vector<64x32xf32>
    %cst_39 = arith.constant dense<0.000000e+00> : vector<64xf32>
    %207 = vector.multi_reduction <add>, %206, %cst_39 [1] : vector<64x32xf32> to vector<64xf32>
    %208 = vector.shape_cast %207 : vector<64xf32> to vector<64x1xf32>
    %cst_40 = arith.constant 1.000000e+00 : f32
    %209 = vector.broadcast %cst_40 : f32 to vector<64x1xf32>
    %210 = arith.subf %208, %209 : vector<64x1xf32>
    %211 = arith.divf %210, %204 : vector<64x1xf32>
    %212 = vector.broadcast %211 : vector<64x1xf32> to vector<64x32xf32>
    %213 = arith.subf %4, %212 : vector<64x32xf32>
    %cst_41 = arith.constant 0.000000e+00 : f32
    %214 = vector.broadcast %cst_41 : f32 to vector<64x32xf32>
    %215 = arith.maximumf %213, %214 : vector<64x32xf32>
    %c0_42 = arith.constant 0 : index
    %c0_43 = arith.constant 0 : index
    %216 = vector.load %arg2[%c0_42, %c0_43] : memref<64x32xf32, #tpu.memory_space<vmem>>, vector<64x32xf32>
    tpu.vector_store %arg2[%c0_42, %c0_43], %215 {strides = array<i32>} : memref<64x32xf32, #tpu.memory_space<vmem>>, vector<64x32xf32>,
    return
  }
  func.func @transform_0(%arg0: i32) -> (i32, i32) {
    %c0_i32 = arith.constant 0 : i32
    %c0_i32_0 = arith.constant 0 : i32
    return %arg0, %c0_i32 : i32, i32
  }
  func.func @transform_1(%arg0: i32) -> (i32, i32) {
    %c0_i32 = arith.constant 0 : i32
    %c0_i32_0 = arith.constant 0 : i32
    return %arg0, %c0_i32 : i32, i32
  }
}

</mosaic_0001>

<llo_original>
// kernel: _sparsemax_2d.1
$region0: #{_sparsemax_2d.1}
  #allocation0 [shape = 'u32[]', space=smem, size = 0x4, offset = 0x4, fixed_abs, tag = 'smem constant byte address 0x4 - core index']
  #allocation1 [shape = 'u32[144,128]{1,0:T(1,128)}', space=vmem, size = 0x12000, scoped, tag = 'internal scratch']
  %s0 = inlined_call_operand.vmem [shape: f32[128,32], index: 0, kind: input, shape index: {}]
  %s1 = inlined_call_operand.vmem [shape: f32[128,32], index: 1, kind: output, shape index: {}]
  %s2 = sld [smem:[#allocation0]]
  $region37: #{_sparsemax_2d.1} parent=0
    _
  %s4 = ssub.s32 1, %s2
  %s5 = scalar_select 0, %s4, %s2
  loop: start=0, step=1, limit=4
  $region2: #{_sparsemax_2d.1} parent=0 // loop_pre_header
    _
  $region3: #{_sparsemax_2d.1} parent=0 // loop_header
    %s7 = sphi 0, %s11
    %p8 = scmp.ge.s32.totalorder %s7, 4
    %s17 = sphi 0, %s19
    %s20 = sphi 0, %s17
    %s21 = sphi 0, %s20
    %s37 = sphi 0, %s21
    %s43 = sphi 0, %s45
    %s46 = sphi 0, %s43
    %s47 = sphi 0, %s46
    %s63 = sphi 0, %s47
  $region4: #{_sparsemax_2d.1} parent=0 // loop_header_branch
    %10 = sbr.rel (%p8) target = $region8
  $region5: #{_sparsemax_2d.1} parent=0 // loop_body
    %s12 = ssub.s32 %s7, 1
    %s13 = ssub.s32 %s7, 2
    %s14 = sadd.s32 %s7, 1
    %s15 = ssub.s32 %s7, %s14
    %p16 = scmp.eq.s32.totalorder %s15, 0
    %s18 = sadd.s32 %s17, 1
    %s19 = scalar_select %p16, %s17, %s18
    %p22 = pneg %p16
    %p23 = scmp.eq.s32.totalorder %s7, 1
    %p24 = por %p22, %p23
    %p25 = scmp.ne.s32.totalorder %s17, %s20
    %p26 = scmp.eq.s32.totalorder %s7, 0
    %p27 = por %p25, %p26
    %p28 = scmp.ne.s32.totalorder %s17, %s20
    %p29 = scmp.eq.s32.totalorder %s12, 1
    %p30 = por %p28, %p29
    %p31 = scmp.ne.s32.totalorder %s20, %s21
    %p32 = scmp.eq.s32.totalorder %s12, 0
    %p33 = por %p31, %p32
    %p34 = scmp.ne.s32.totalorder %s20, %s21
    %p35 = scmp.eq.s32.totalorder %s13, 1
    %p36 = por %p34, %p35
    %p38 = scmp.ne.s32.totalorder %s21, %s37
    %p39 = scmp.eq.s32.totalorder %s13, 0
    %p40 = por %p38, %p39
    %s41 = ssub.s32 %s7, %s14
    %p42 = scmp.eq.s32.totalorder %s41, 0
    %s44 = sadd.s32 %s43, 1
    %s45 = scalar_select %p42, %s43, %s44
    %p48 = pneg %p42
    %p49 = scmp.eq.s32.totalorder %s7, 1
    %p50 = por %p48, %p49
    %p51 = scmp.ne.s32.totalorder %s43, %s46
    %p52 = scmp.eq.s32.totalorder %s7, 0
    %p53 = por %p51, %p52
    %p54 = scmp.ne.s32.totalorder %s43, %s46
    %p55 = scmp.eq.s32.totalorder %s12, 1
    %p56 = por %p54, %p55
    %p57 = scmp.ne.s32.totalorder %s46, %s47
    %p58 = scmp.eq.s32.totalorder %s12, 0
    %p59 = por %p57, %p58
    %p60 = scmp.ne.s32.totalorder %s46, %s47
    %p61 = scmp.eq.s32.totalorder %s13, 1
    %p62 = por %p60, %p61
    %p64 = scmp.ne.s32.totalorder %s47, %s63
    %p65 = scmp.eq.s32.totalorder %s13, 0
    %p66 = por %p64, %p65
    %p67 = scmp.le.s32.totalorder 1, %s7
    %p68 = scmp.lt.s32.totalorder %s7, 3
    %p69 = pnand %p67, %p68
    %p70 = pneg %p69
    // Predicated region
    $region9: #{_sparsemax_2d.1} parent=5 // pred_check
      _
    $region10: #{_sparsemax_2d.1} parent=5 // pred_check_branch
      %72 = sbr.rel (%p69) target = $region12
    $region11: #{_sparsemax_2d.1} parent=5 // pred_region
      %s73 = ssub.s32 %s7, 1
    $region12: #{_sparsemax_2d.1} parent=5 // pred_fallthru
      _
    %p74 = scmp.lt.s32.totalorder %s7, 2
    // Predicated region
    $region13: #{_sparsemax_2d.1} parent=5 // pred_check
      %p75 = pneg %p74
    $region14: #{_sparsemax_2d.1} parent=5 // pred_check_branch
      %77 = sbr.rel (%p75) target = $region16
    $region15: #{_sparsemax_2d.1} parent=5 // pred_region
      // Predicated region
      $region17: #{_sparsemax_2d.1} parent=15 // pred_check
        %p78 = pneg %p27
      $region18: #{_sparsemax_2d.1} parent=15 // pred_check_branch
        %80 = sbr.rel (%p78) target = $region20
      $region19: #{_sparsemax_2d.1} parent=15 // pred_region
        %s81 = smul.u32 8, %s7
        %p82 = scmp.lt.s32.totalorder %s81, 15
        %s83 = scalar_select %p82, %s81, 15
        %s84 = smul.addr %s83, 8
        %s85 = scalar_lea.vmem %s0, %s84
        %s86 = smul.u32 8, %s7
      $region20: #{_sparsemax_2d.1} parent=15 // pred_fallthru
        _
    $region16: #{_sparsemax_2d.1} parent=5 // pred_fallthru
      _
    %p87 = scmp.le.s32.totalorder 1, %s7
    %p88 = scmp.lt.s32.totalorder %s7, 3
    %p89 = pnand %p87, %p88
    %p90 = pneg %p89
    // Predicated region
    $region21: #{_sparsemax_2d.1} parent=5 // pred_check
      _
    $region22: #{_sparsemax_2d.1} parent=5 // pred_check_branch
      %92 = sbr.rel (%p89) target = $region24
    $region23: #{_sparsemax_2d.1} parent=5 // pred_region
      %s93 = ssub.s32 %s7, 1
      %s94 = smul.u32 8, %s12
      %p95 = scmp.lt.s32.totalorder %s94, 15
      %s96 = scalar_select %p95, %s94, 15
      %s97 = smul.addr %s96, 8
      %s98 = scalar_lea.vmem %s0, %s97
      %p99 = pneg %p33
      %p100 = pneg %p30
      %p101 = pneg %p59
      %p102 = pneg %p56
      %s103 = smul.u32 8, %s12
      %p104 = scmp.lt.s32.totalorder %s103, 15
      %s105 = scalar_select %p104, %s103, 15
      %s106 = smul.addr %s105, 8
      %s107 = scalar_lea.vmem %s1, %s106
      %s108 = smul.u32 8, %s12
      %p109 = scmp.lt.s32.totalorder %s108, 15
      %s110 = scalar_select %p109, %s108, 15
      %s111 = smul.addr %s110, 8
      %s112 = scalar_lea.vmem %s0, %s111
      %s113 = smul.u32 8, %s12
      %s114 = smul.u32 8, %s12
      %p115 = scmp.lt.s32.totalorder %s114, 15
      %s116 = scalar_select %p115, %s114, 15
      %s117 = smul.addr %s116, 8
      %s118 = scalar_lea.vmem %s1, %s117
      %s119 = smul.u32 8, %s12
      %v120 = vld [vmem:[%s112] sm:$0xff]
      %v121 = vld [vmem:[%s112 + $0x8] sm:$0xff]
      %v122 = vld [vmem:[%s112 + $0x10] sm:$0xff]
      %v123 = vld [vmem:[%s112 + $0x18] sm:$0xff]
      %v124 = vld [vmem:[%s112 + $0x20] sm:$0xff]
      %v125 = vld [vmem:[%s112 + $0x28] sm:$0xff]
      %v126 = vld [vmem:[%s112 + $0x30] sm:$0xff]
      %v127 = vld [vmem:[%s112 + $0x38] sm:$0xff]
      %vm128 = vcmask 261120
      %v129 = vsel %vm128, %v120, -inf
      %130 = vmax.xlane.f32.xlu0 %v129
      %v131 = vpop.xlane.xlu0 %130
      %v132 = vsel %vm128, %v121, -inf
      %133 = vmax.xlane.f32.xlu0 %v132
      %v134 = vpop.xlane.xlu0 %133
      %v135 = vsel %vm128, %v122, -inf
      %136 = vmax.xlane.f32.xlu0 %v135
      %v137 = vpop.xlane.xlu0 %136
      %v138 = vsel %vm128, %v123, -inf
      %139 = vmax.xlane.f32.xlu0 %v138
      %v140 = vpop.xlane.xlu0 %139
      %v141 = vsel %vm128, %v124, -inf
      %142 = vmax.xlane.f32.xlu0 %v141
      %v143 = vpop.xlane.xlu0 %142
      %v144 = vsel %vm128, %v125, -inf
      %145 = vmax.xlane.f32.xlu0 %v144
      %v146 = vpop.xlane.xlu0 %145
      %v147 = vsel %vm128, %v126, -inf
      %148 = vmax.xlane.f32.xlu0 %v147
      %v149 = vpop.xlane.xlu0 %148
      %v150 = vsel %vm128, %v127, -inf
      %151 = vmax.xlane.f32.xlu0 %v150
      %v152 = vpop.xlane.xlu0 %151
      %v153 = vsub.f32 %v120, %v131
      %v154 = vsub.f32 %v121, %v134
      %v155 = vsub.f32 %v122, %v137
      %v156 = vsub.f32 %v123, %v140
      %v157 = vsub.f32 %v124, %v143
      %v158 = vsub.f32 %v125, %v146
      %v159 = vsub.f32 %v126, %v149
      %v160 = vsub.f32 %v127, %v152
      %162 = vset.pattern.permute.xlu0 0
      %163 = vperm.xlu0 %162, %v153
      %v164 = vpop.permute.xlu0 %163
      %167 = vset.pattern.permute.xlu0 0
      %168 = vperm.xlu0 %167, %v154
      %v169 = vpop.permute.xlu0 %168
      %172 = vset.pattern.permute.xlu0 0
      %173 = vperm.xlu0 %172, %v155
      %v174 = vpop.permute.xlu0 %173
      %177 = vset.pattern.permute.xlu0 0
      %178 = vperm.xlu0 %177, %v156
      %v179 = vpop.permute.xlu0 %178
      %182 = vset.pattern.permute.xlu0 0
      %183 = vperm.xlu0 %182, %v157
      %v184 = vpop.permute.xlu0 %183
      %187 = vset.pattern.permute.xlu0 0
      %188 = vperm.xlu0 %187, %v158
      %v189 = vpop.permute.xlu0 %188
      %192 = vset.pattern.permute.xlu0 0
      %193 = vperm.xlu0 %192, %v159
      %v194 = vpop.permute.xlu0 %193
      %197 = vset.pattern.permute.xlu0 0
      %198 = vperm.xlu0 %197, %v160
      %v199 = vpop.permute.xlu0 %198
      %v201 = vsub.f32 %v153, %v164
      %v202 = vsub.f32 %v154, %v169
      %v203 = vsub.f32 %v155, %v174
      %v204 = vsub.f32 %v156, %v179
      %v205 = vsub.f32 %v157, %v184
      %v206 = vsub.f32 %v158, %v189
      %v207 = vsub.f32 %v159, %v194
      %v208 = vsub.f32 %v160, %v199
      %v209 = vmin.f32 %v201, 0.0
      %v210 = vmin.f32 %v202, 0.0
      %v211 = vmin.f32 %v203, 0.0
      %v212 = vmin.f32 %v204, 0.0
      %v213 = vmin.f32 %v205, 0.0
      %v214 = vmin.f32 %v206, 0.0
      %v215 = vmin.f32 %v207, 0.0
      %v216 = vmin.f32 %v208, 0.0
      %v217 = vadd.f32 %v209, 0.0
      %v218 = vadd.f32 %v210, 0.0
      %v219 = vadd.f32 %v211, 0.0
      %v220 = vadd.f32 %v212, 0.0
      %v221 = vadd.f32 %v213, 0.0
      %v222 = vadd.f32 %v214, 0.0
      %v223 = vadd.f32 %v215, 0.0
      %v224 = vadd.f32 %v216, 0.0
      %225 = vset.pattern.permute.xlu0 1
      %226 = vperm.xlu0 %225, %v153
      %v227 = vpop.permute.xlu0 %226
      %229 = vset.pattern.permute.xlu0 1
      %230 = vperm.xlu0 %229, %v154
      %v231 = vpop.permute.xlu0 %230
      %233 = vset.pattern.permute.xlu0 1
      %234 = vperm.xlu0 %233, %v155
      %v235 = vpop.permute.xlu0 %234
      %237 = vset.pattern.permute.xlu0 1
      %238 = vperm.xlu0 %237, %v156
      %v239 = vpop.permute.xlu0 %238
      %241 = vset.pattern.permute.xlu0 1
      %242 = vperm.xlu0 %241, %v157
      %v243 = vpop.permute.xlu0 %242
      %245 = vset.pattern.permute.xlu0 1
      %246 = vperm.xlu0 %245, %v158
      %v247 = vpop.permute.xlu0 %246
      %249 = vset.pattern.permute.xlu0 1
      %250 = vperm.xlu0 %249, %v159
      %v251 = vpop.permute.xlu0 %250
      %253 = vset.pattern.permute.xlu0 1
      %254 = vperm.xlu0 %253, %v160
      %v255 = vpop.permute.xlu0 %254
      %v257 = vsub.f32 %v153, %v227
      %v258 = vsub.f32 %v154, %v231
      %v259 = vsub.f32 %v155, %v235
      %v260 = vsub.f32 %v156, %v239
      %v261 = vsub.f32 %v157, %v243
      %v262 = vsub.f32 %v158, %v247
      %v263 = vsub.f32 %v159, %v251
      %v264 = vsub.f32 %v160, %v255
      %v265 = vmin.f32 %v257, 0.0
      %v266 = vmin.f32 %v258, 0.0
      %v267 = vmin.f32 %v259, 0.0
      %v268 = vmin.f32 %v260, 0.0
      %v269 = vmin.f32 %v261, 0.0
      %v270 = vmin.f32 %v262, 0.0
      %v271 = vmin.f32 %v263, 0.0
      %v272 = vmin.f32 %v264, 0.0
      %v273 = vadd.f32 %v217, %v265
      %v274 = vadd.f32 %v218, %v266
      %v275 = vadd.f32 %v219, %v267
      %v276 = vadd.f32 %v220, %v268
      %v277 = vadd.f32 %v221, %v269
      %v278 = vadd.f32 %v222, %v270
      %v279 = vadd.f32 %v223, %v271
      %v280 = vadd.f32 %v224, %v272
      %281 = vset.pattern.permute.xlu0 2
      %282 = vperm.xlu0 %281, %v153
      %v283 = vpop.permute.xlu0 %282
      %285 = vset.pattern.permute.xlu0 2
      %286 = vperm.xlu0 %285, %v154
      %v287 = vpop.permute.xlu0 %286
      %289 = vset.pattern.permute.xlu0 2
      %290 = vperm.xlu0 %289, %v155
      %v291 = vpop.permute.xlu0 %290
      %293 = vset.pattern.permute.xlu0 2
      %294 = vperm.xlu0 %293, %v156
      %v295 = vpop.permute.xlu0 %294
      %297 = vset.pattern.permute.xlu0 2
      %298 = vperm.xlu0 %297, %v157
      %v299 = vpop.permute.xlu0 %298
      %301 = vset.pattern.permute.xlu0 2
      %302 = vperm.xlu0 %301, %v158
      %v303 = vpop.permute.xlu0 %302
      %305 = vset.pattern.permute.xlu0 2
      %306 = vperm.xlu0 %305, %v159
      %v307 = vpop.permute.xlu0 %306
      %309 = vset.pattern.permute.xlu0 2
      %310 = vperm.xlu0 %309, %v160
      %v311 = vpop.permute.xlu0 %310
      %v313 = vsub.f32 %v153, %v283
      %v314 = vsub.f32 %v154, %v287
      %v315 = vsub.f32 %v155, %v291
      %v316 = vsub.f32 %v156, %v295
      %v317 = vsub.f32 %v157, %v299
      %v318 = vsub.f32 %v158, %v303
      %v319 = vsub.f32 %v159, %v307
      %v320 = vsub.f32 %v160, %v311
      %v321 = vmin.f32 %v313, 0.0
      %v322 = vmin.f32 %v314, 0.0
      %v323 = vmin.f32 %v315, 0.0
      %v324 = vmin.f32 %v316, 0.0
      %v325 = vmin.f32 %v317, 0.0
      %v326 = vmin.f32 %v318, 0.0
      %v327 = vmin.f32 %v319, 0.0
      %v328 = vmin.f32 %v320, 0.0
      %v329 = vadd.f32 %v273, %v321
      %v330 = vadd.f32 %v274, %v322
      %v331 = vadd.f32 %v275, %v323
      %v332 = vadd.f32 %v276, %v324
      %v333 = vadd.f32 %v277, %v325
      %v334 = vadd.f32 %v278, %v326
      %v335 = vadd.f32 %v279, %v327
      %v336 = vadd.f32 %v280, %v328
      %337 = vset.pattern.permute.xlu0 3
      %338 = vperm.xlu0 %337, %v153
      %v339 = vpop.permute.xlu0 %338
      %341 = vset.pattern.permute.xlu0 3
      %342 = vperm.xlu0 %341, %v154
      %v343 = vpop.permute.xlu0 %342
      %345 = vset.pattern.permute.xlu0 3
      %346 = vperm.xlu0 %345, %v155
      %v347 = vpop.permute.xlu0 %346
      %349 = vset.pattern.permute.xlu0 3
      %350 = vperm.xlu0 %349, %v156
      %v351 = vpop.permute.xlu0 %350
      %353 = vset.pattern.permute.xlu0 3
      %354 = vperm.xlu0 %353, %v157
      %v355 = vpop.permute.xlu0 %354
      %357 = vset.pattern.permute.xlu0 3
      %358 = vperm.xlu0 %357, %v158
      %v359 = vpop.permute.xlu0 %358
      %361 = vset.pattern.permute.xlu0 3
      %362 = vperm.xlu0 %361, %v159
      %v363 = vpop.permute.xlu0 %362
      %365 = vset.pattern.permute.xlu0 3
      %366 = vperm.xlu0 %365, %v160
      %v367 = vpop.permute.xlu0 %366
      %v369 = vsub.f32 %v153, %v339
      %v370 = vsub.f32 %v154, %v343
      %v371 = vsub.f32 %v155, %v347
      %v372 = vsub.f32 %v156, %v351
      %v373 = vsub.f32 %v157, %v355
      %v374 = vsub.f32 %v158, %v359
      %v375 = vsub.f32 %v159, %v363
      %v376 = vsub.f32 %v160, %v367
      %v377 = vmin.f32 %v369, 0.0
      %v378 = vmin.f32 %v370, 0.0
      %v379 = vmin.f32 %v371, 0.0
      %v380 = vmin.f32 %v372, 0.0
      %v381 = vmin.f32 %v373, 0.0
      %v382 = vmin.f32 %v374, 0.0
      %v383 = vmin.f32 %v375, 0.0
      %v384 = vmin.f32 %v376, 0.0
      %v385 = vadd.f32 %v329, %v377
      %v386 = vadd.f32 %v330, %v378
      %v387 = vadd.f32 %v331, %v379
      %v388 = vadd.f32 %v332, %v380
      %v389 = vadd.f32 %v333, %v381
      %v390 = vadd.f32 %v334, %v382
      %v391 = vadd.f32 %v335, %v383
      %v392 = vadd.f32 %v336, %v384
      %393 = vset.pattern.permute.xlu0 4
      %394 = vperm.xlu0 %393, %v153
      %v395 = vpop.permute.xlu0 %394
      %397 = vset.pattern.permute.xlu0 4
      %398 = vperm.xlu0 %397, %v154
      %v399 = vpop.permute.xlu0 %398
      %401 = vset.pattern.permute.xlu0 4
      %402 = vperm.xlu0 %401, %v155
      %v403 = vpop.permute.xlu0 %402
      %405 = vset.pattern.permute.xlu0 4
      %406 = vperm.xlu0 %405, %v156
      %v407 = vpop.permute.xlu0 %406
      %409 = vset.pattern.permute.xlu0 4
      %410 = vperm.xlu0 %409, %v157
      %v411 = vpop.permute.xlu0 %410
      %413 = vset.pattern.permute.xlu0 4
      %414 = vperm.xlu0 %413, %v158
      %v415 = vpop.permute.xlu0 %414
      %417 = vset.pattern.permute.xlu0 4
      %418 = vperm.xlu0 %417, %v159
      %v419 = vpop.permute.xlu0 %418
      %421 = vset.pattern.permute.xlu0 4
      %422 = vperm.xlu0 %421, %v160
      %v423 = vpop.permute.xlu0 %422
      %v425 = vsub.f32 %v153, %v395
      %v426 = vsub.f32 %v154, %v399
      %v427 = vsub.f32 %v155, %v403
      %v428 = vsub.f32 %v156, %v407
      %v429 = vsub.f32 %v157, %v411
      %v430 = vsub.f32 %v158, %v415
      %v431 = vsub.f32 %v159, %v419
      %v432 = vsub.f32 %v160, %v423
      %v433 = vmin.f32 %v425, 0.0
      %v434 = vmin.f32 %v426, 0.0
      %v435 = vmin.f32 %v427, 0.0
      %v436 = vmin.f32 %v428, 0.0
      %v437 = vmin.f32 %v429, 0.0
      %v438 = vmin.f32 %v430, 0.0
      %v439 = vmin.f32 %v431, 0.0
      %v440 = vmin.f32 %v432, 0.0
      %v441 = vadd.f32 %v385, %v433
      %v442 = vadd.f32 %v386, %v434
      %v443 = vadd.f32 %v387, %v435
      %v444 = vadd.f32 %v388, %v436
      %v445 = vadd.f32 %v389, %v437
      %v446 = vadd.f32 %v390, %v438
      %v447 = vadd.f32 %v391, %v439
      %v448 = vadd.f32 %v392, %v440
      %449 = vset.pattern.permute.xlu0 5
      %450 = vperm.xlu0 %449, %v153
      %v451 = vpop.permute.xlu0 %450
      %453 = vset.pattern.permute.xlu0 5
      %454 = vperm.xlu0 %453, %v154
      %v455 = vpop.permute.xlu0 %454
      %457 = vset.pattern.permute.xlu0 5
      %458 = vperm.xlu0 %457, %v155
      %v459 = vpop.permute.xlu0 %458
      %461 = vset.pattern.permute.xlu0 5
      %462 = vperm.xlu0 %461, %v156
      %v463 = vpop.permute.xlu0 %462
      %465 = vset.pattern.permute.xlu0 5
      %466 = vperm.xlu0 %465, %v157
      %v467 = vpop.permute.xlu0 %466
      %469 = vset.pattern.permute.xlu0 5
      %470 = vperm.xlu0 %469, %v158
      %v471 = vpop.permute.xlu0 %470
      %473 = vset.pattern.permute.xlu0 5
      %474 = vperm.xlu0 %473, %v159
      %v475 = vpop.permute.xlu0 %474
      %477 = vset.pattern.permute.xlu0 5
      %478 = vperm.xlu0 %477, %v160
      %v479 = vpop.permute.xlu0 %478
      %v481 = vsub.f32 %v153, %v451
      %v482 = vsub.f32 %v154, %v455
      %v483 = vsub.f32 %v155, %v459
      %v484 = vsub.f32 %v156, %v463
      %v485 = vsub.f32 %v157, %v467
      %v486 = vsub.f32 %v158, %v471
      %v487 = vsub.f32 %v159, %v475
      %v488 = vsub.f32 %v160, %v479
      %v489 = vmin.f32 %v481, 0.0
      %v490 = vmin.f32 %v482, 0.0
      %v491 = vmin.f32 %v483, 0.0
      %v492 = vmin.f32 %v484, 0.0
      %v493 = vmin.f32 %v485, 0.0
      %v494 = vmin.f32 %v486, 0.0
      %v495 = vmin.f32 %v487, 0.0
      %v496 = vmin.f32 %v488, 0.0
      %v497 = vadd.f32 %v441, %v489
      %v498 = vadd.f32 %v442, %v490
      %v499 = vadd.f32 %v443, %v491
      %v500 = vadd.f32 %v444, %v492
      %v501 = vadd.f32 %v445, %v493
      %v502 = vadd.f32 %v446, %v494
      %v503 = vadd.f32 %v447, %v495
      %v504 = vadd.f32 %v448, %v496
      %505 = vset.pattern.permute.xlu0 6
      %506 = vperm.xlu0 %505, %v153
      %v507 = vpop.permute.xlu0 %506
      %509 = vset.pattern.permute.xlu0 6
      %510 = vperm.xlu0 %509, %v154
      %v511 = vpop.permute.xlu0 %510
      %513 = vset.pattern.permute.xlu0 6
      %514 = vperm.xlu0 %513, %v155
      %v515 = vpop.permute.xlu0 %514
      %517 = vset.pattern.permute.xlu0 6
      %518 = vperm.xlu0 %517, %v156
      %v519 = vpop.permute.xlu0 %518
      %521 = vset.pattern.permute.xlu0 6
      %522 = vperm.xlu0 %521, %v157
      %v523 = vpop.permute.xlu0 %522
      %525 = vset.pattern.permute.xlu0 6
      %526 = vperm.xlu0 %525, %v158
      %v527 = vpop.permute.xlu0 %526
      %529 = vset.pattern.permute.xlu0 6
      %530 = vperm.xlu0 %529, %v159
      %v531 = vpop.permute.xlu0 %530
      %533 = vset.pattern.permute.xlu0 6
      %534 = vperm.xlu0 %533, %v160
      %v535 = vpop.permute.xlu0 %534
      %v537 = vsub.f32 %v153, %v507
      %v538 = vsub.f32 %v154, %v511
      %v539 = vsub.f32 %v155, %v515
      %v540 = vsub.f32 %v156, %v519
      %v541 = vsub.f32 %v157, %v523
      %v542 = vsub.f32 %v158, %v527
      %v543 = vsub.f32 %v159, %v531
      %v544 = vsub.f32 %v160, %v535
      %v545 = vmin.f32 %v537, 0.0
      %v546 = vmin.f32 %v538, 0.0
      %v547 = vmin.f32 %v539, 0.0
      %v548 = vmin.f32 %v540, 0.0
      %v549 = vmin.f32 %v541, 0.0
      %v550 = vmin.f32 %v542, 0.0
      %v551 = vmin.f32 %v543, 0.0
      %v552 = vmin.f32 %v544, 0.0
      %v553 = vadd.f32 %v497, %v545
      %v554 = vadd.f32 %v498, %v546
      %v555 = vadd.f32 %v499, %v547
      %v556 = vadd.f32 %v500, %v548
      %v557 = vadd.f32 %v501, %v549
      %v558 = vadd.f32 %v502, %v550
      %v559 = vadd.f32 %v503, %v551
      %v560 = vadd.f32 %v504, %v552
      %561 = vset.pattern.permute.xlu0 7
      %562 = vperm.xlu0 %561, %v153
      %v563 = vpop.permute.xlu0 %562
      %565 = vset.pattern.permute.xlu0 7
      %566 = vperm.xlu0 %565, %v154
      %v567 = vpop.permute.xlu0 %566
      %569 = vset.pattern.permute.xlu0 7
      %570 = vperm.xlu0 %569, %v155
      %v571 = vpop.permute.xlu0 %570
      %573 = vset.pattern.permute.xlu0 7
      %574 = vperm.xlu0 %573, %v156
      %v575 = vpop.permute.xlu0 %574
      %577 = vset.pattern.permute.xlu0 7
      %578 = vperm.xlu0 %577, %v157
      %v579 = vpop.permute.xlu0 %578
      %581 = vset.pattern.permute.xlu0 7
      %582 = vperm.xlu0 %581, %v158
      %v583 = vpop.permute.xlu0 %582
      %585 = vset.pattern.permute.xlu0 7
      %586 = vperm.xlu0 %585, %v159
      %v587 = vpop.permute.xlu0 %586
      %589 = vset.pattern.permute.xlu0 7
      %590 = vperm.xlu0 %589, %v160
      %v591 = vpop.permute.xlu0 %590
      %v593 = vsub.f32 %v153, %v563
      %v594 = vsub.f32 %v154, %v567
      %v595 = vsub.f32 %v155, %v571
      %v596 = vsub.f32 %v156, %v575
      %v597 = vsub.f32 %v157, %v579
      %v598 = vsub.f32 %v158, %v583
      %v599 = vsub.f32 %v159, %v587
      %v600 = vsub.f32 %v160, %v591
      %v601 = vmin.f32 %v593, 0.0
      %v602 = vmin.f32 %v594, 0.0
      %v603 = vmin.f32 %v595, 0.0
      %v604 = vmin.f32 %v596, 0.0
      %v605 = vmin.f32 %v597, 0.0
      %v606 = vmin.f32 %v598, 0.0
      %v607 = vmin.f32 %v599, 0.0
      %v608 = vmin.f32 %v600, 0.0
      %v609 = vadd.f32 %v553, %v601
      %v610 = vadd.f32 %v554, %v602
      %v611 = vadd.f32 %v555, %v603
      %v612 = vadd.f32 %v556, %v604
      %v613 = vadd.f32 %v557, %v605
      %v614 = vadd.f32 %v558, %v606
      %v615 = vadd.f32 %v559, %v607
      %v616 = vadd.f32 %v560, %v608
      %617 = vset.pattern.permute.xlu0 8
      %618 = vperm.xlu0 %617, %v153
      %v619 = vpop.permute.xlu0 %618
      %621 = vset.pattern.permute.xlu0 8
      %622 = vperm.xlu0 %621, %v154
      %v623 = vpop.permute.xlu0 %622
      %625 = vset.pattern.permute.xlu0 8
      %626 = vperm.xlu0 %625, %v155
      %v627 = vpop.permute.xlu0 %626
      %629 = vset.pattern.permute.xlu0 8
      %630 = vperm.xlu0 %629, %v156
      %v631 = vpop.permute.xlu0 %630
      %633 = vset.pattern.permute.xlu0 8
      %634 = vperm.xlu0 %633, %v157
      %v635 = vpop.permute.xlu0 %634
      %637 = vset.pattern.permute.xlu0 8
      %638 = vperm.xlu0 %637, %v158
      %v639 = vpop.permute.xlu0 %638
      %641 = vset.pattern.permute.xlu0 8
      %642 = vperm.xlu0 %641, %v159
      %v643 = vpop.permute.xlu0 %642
      %645 = vset.pattern.permute.xlu0 8
      %646 = vperm.xlu0 %645, %v160
      %v647 = vpop.permute.xlu0 %646
      %v649 = vsub.f32 %v153, %v619
      %v650 = vsub.f32 %v154, %v623
      %v651 = vsub.f32 %v155, %v627
      %v652 = vsub.f32 %v156, %v631
      %v653 = vsub.f32 %v157, %v635
      %v654 = vsub.f32 %v158, %v639
      %v655 = vsub.f32 %v159, %v643
      %v656 = vsub.f32 %v160, %v647
      %v657 = vmin.f32 %v649, 0.0
      %v658 = vmin.f32 %v650, 0.0
      %v659 = vmin.f32 %v651, 0.0
      %v660 = vmin.f32 %v652, 0.0
      %v661 = vmin.f32 %v653, 0.0
      %v662 = vmin.f32 %v654, 0.0
      %v663 = vmin.f32 %v655, 0.0
      %v664 = vmin.f32 %v656, 0.0
      %v665 = vadd.f32 %v609, %v657
      %v666 = vadd.f32 %v610, %v658
      %v667 = vadd.f32 %v611, %v659
      %v668 = vadd.f32 %v612, %v660
      %v669 = vadd.f32 %v613, %v661
      %v670 = vadd.f32 %v614, %v662
      %v671 = vadd.f32 %v615, %v663
      %v672 = vadd.f32 %v616, %v664
      %673 = vset.pattern.permute.xlu0 9
      %674 = vperm.xlu0 %673, %v153
      %v675 = vpop.permute.xlu0 %674
      %677 = vset.pattern.permute.xlu0 9
      %678 = vperm.xlu0 %677, %v154
      %v679 = vpop.permute.xlu0 %678
      %681 = vset.pattern.permute.xlu0 9
      %682 = vperm.xlu0 %681, %v155
      %v683 = vpop.permute.xlu0 %682
      %685 = vset.pattern.permute.xlu0 9
      %686 = vperm.xlu0 %685, %v156
      %v687 = vpop.permute.xlu0 %686
      %689 = vset.pattern.permute.xlu0 9
      %690 = vperm.xlu0 %689, %v157
      %v691 = vpop.permute.xlu0 %690
      %693 = vset.pattern.permute.xlu0 9
      %694 = vperm.xlu0 %693, %v158
      %v695 = vpop.permute.xlu0 %694
      %697 = vset.pattern.permute.xlu0 9
      %698 = vperm.xlu0 %697, %v159
      %v699 = vpop.permute.xlu0 %698
      %701 = vset.pattern.permute.xlu0 9
      %702 = vperm.xlu0 %701, %v160
      %v703 = vpop.permute.xlu0 %702
      %v705 = vsub.f32 %v153, %v675
      %v706 = vsub.f32 %v154, %v679
      %v707 = vsub.f32 %v155, %v683
      %v708 = vsub.f32 %v156, %v687
      %v709 = vsub.f32 %v157, %v691
      %v710 = vsub.f32 %v158, %v695
      %v711 = vsub.f32 %v159, %v699
      %v712 = vsub.f32 %v160, %v703
      %v713 = vmin.f32 %v705, 0.0
      %v714 = vmin.f32 %v706, 0.0
      %v715 = vmin.f32 %v707, 0.0
      %v716 = vmin.f32 %v708, 0.0
      %v717 = vmin.f32 %v709, 0.0
      %v718 = vmin.f32 %v710, 0.0
      %v719 = vmin.f32 %v711, 0.0
      %v720 = vmin.f32 %v712, 0.0
      %v721 = vadd.f32 %v665, %v713
      %v722 = vadd.f32 %v666, %v714
      %v723 = vadd.f32 %v667, %v715
      %v724 = vadd.f32 %v668, %v716
      %v725 = vadd.f32 %v669, %v717
      %v726 = vadd.f32 %v670, %v718
      %v727 = vadd.f32 %v671, %v719
      %v728 = vadd.f32 %v672, %v720
      %729 = vset.pattern.permute.xlu0 10
      %730 = vperm.xlu0 %729, %v153
      %v731 = vpop.permute.xlu0 %730
      %733 = vset.pattern.permute.xlu0 10
      %734 = vperm.xlu0 %733, %v154
      %v735 = vpop.permute.xlu0 %734
      %737 = vset.pattern.permute.xlu0 10
      %738 = vperm.xlu0 %737, %v155
      %v739 = vpop.permute.xlu0 %738
      %741 = vset.pattern.permute.xlu0 10
      %742 = vperm.xlu0 %741, %v156
      %v743 = vpop.permute.xlu0 %742
      %745 = vset.pattern.permute.xlu0 10
      %746 = vperm.xlu0 %745, %v157
      %v747 = vpop.permute.xlu0 %746
      %749 = vset.pattern.permute.xlu0 10
      %750 = vperm.xlu0 %749, %v158
      %v751 = vpop.permute.xlu0 %750
      %753 = vset.pattern.permute.xlu0 10
      %754 = vperm.xlu0 %753, %v159
      %v755 = vpop.permute.xlu0 %754
      %757 = vset.pattern.permute.xlu0 10
      %758 = vperm.xlu0 %757, %v160
      %v759 = vpop.permute.xlu0 %758
      %v761 = vsub.f32 %v153, %v731
      %v762 = vsub.f32 %v154, %v735
      %v763 = vsub.f32 %v155, %v739
      %v764 = vsub.f32 %v156, %v743
      %v765 = vsub.f32 %v157, %v747
      %v766 = vsub.f32 %v158, %v751
      %v767 = vsub.f32 %v159, %v755
      %v768 = vsub.f32 %v160, %v759
      %v769 = vmin.f32 %v761, 0.0
      %v770 = vmin.f32 %v762, 0.0
      %v771 = vmin.f32 %v763, 0.0
      %v772 = vmin.f32 %v764, 0.0
      %v773 = vmin.f32 %v765, 0.0
      %v774 = vmin.f32 %v766, 0.0
      %v775 = vmin.f32 %v767, 0.0
      %v776 = vmin.f32 %v768, 0.0
      %v777 = vadd.f32 %v721, %v769
      %v778 = vadd.f32 %v722, %v770
      %v779 = vadd.f32 %v723, %v771
      %v780 = vadd.f32 %v724, %v772
      %v781 = vadd.f32 %v725, %v773
      %v782 = vadd.f32 %v726, %v774
      %v783 = vadd.f32 %v727, %v775
      %v784 = vadd.f32 %v728, %v776
      %785 = vset.pattern.permute.xlu0 11
      %786 = vperm.xlu0 %785, %v153
      %v787 = vpop.permute.xlu0 %786
      %789 = vset.pattern.permute.xlu0 11
      %790 = vperm.xlu0 %789, %v154
      %v791 = vpop.permute.xlu0 %790
      %793 = vset.pattern.permute.xlu0 11
      %794 = vperm.xlu0 %793, %v155
      %v795 = vpop.permute.xlu0 %794
      %797 = vset.pattern.permute.xlu0 11
      %798 = vperm.xlu0 %797, %v156
      %v799 = vpop.permute.xlu0 %798
      %801 = vset.pattern.permute.xlu0 11
      %802 = vperm.xlu0 %801, %v157
      %v803 = vpop.permute.xlu0 %802
      %805 = vset.pattern.permute.xlu0 11
      %806 = vperm.xlu0 %805, %v158
      %v807 = vpop.permute.xlu0 %806
      %809 = vset.pattern.permute.xlu0 11
      %810 = vperm.xlu0 %809, %v159
      %v811 = vpop.permute.xlu0 %810
      %813 = vset.pattern.permute.xlu0 11
      %814 = vperm.xlu0 %813, %v160
      %v815 = vpop.permute.xlu0 %814
      %v817 = vsub.f32 %v153, %v787
      %v818 = vsub.f32 %v154, %v791
      %v819 = vsub.f32 %v155, %v795
      %v820 = vsub.f32 %v156, %v799
      %v821 = vsub.f32 %v157, %v803
      %v822 = vsub.f32 %v158, %v807
      %v823 = vsub.f32 %v159, %v811
      %v824 = vsub.f32 %v160, %v815
      %v825 = vmin.f32 %v817, 0.0
      %v826 = vmin.f32 %v818, 0.0
      %v827 = vmin.f32 %v819, 0.0
      %v828 = vmin.f32 %v820, 0.0
      %v829 = vmin.f32 %v821, 0.0
      %v830 = vmin.f32 %v822, 0.0
      %v831 = vmin.f32 %v823, 0.0
      %v832 = vmin.f32 %v824, 0.0
      %v833 = vadd.f32 %v777, %v825
      %v834 = vadd.f32 %v778, %v826
      %v835 = vadd.f32 %v779, %v827
      %v836 = vadd.f32 %v780, %v828
      %v837 = vadd.f32 %v781, %v829
      %v838 = vadd.f32 %v782, %v830
      %v839 = vadd.f32 %v783, %v831
      %v840 = vadd.f32 %v784, %v832
      %841 = vset.pattern.permute.xlu0 12
      %842 = vperm.xlu0 %841, %v153
      %v843 = vpop.permute.xlu0 %842
      %845 = vset.pattern.permute.xlu0 12
      %846 = vperm.xlu0 %845, %v154
      %v847 = vpop.permute.xlu0 %846
      %849 = vset.pattern.permute.xlu0 12
      %850 = vperm.xlu0 %849, %v155
      %v851 = vpop.permute.xlu0 %850
      %853 = vset.pattern.permute.xlu0 12
      %854 = vperm.xlu0 %853, %v156
      %v855 = vpop.permute.xlu0 %854
      %857 = vset.pattern.permute.xlu0 12
      %858 = vperm.xlu0 %857, %v157
      %v859 = vpop.permute.xlu0 %858
      %861 = vset.pattern.permute.xlu0 12
      %862 = vperm.xlu0 %861, %v158
      %v863 = vpop.permute.xlu0 %862
      %865 = vset.pattern.permute.xlu0 12
      %866 = vperm.xlu0 %865, %v159
      %v867 = vpop.permute.xlu0 %866
      %869 = vset.pattern.permute.xlu0 12
      %870 = vperm.xlu0 %869, %v160
      %v871 = vpop.permute.xlu0 %870
      %v873 = vsub.f32 %v153, %v843
      %v874 = vsub.f32 %v154, %v847
      %v875 = vsub.f32 %v155, %v851
      %v876 = vsub.f32 %v156, %v855
      %v877 = vsub.f32 %v157, %v859
      %v878 = vsub.f32 %v158, %v863
      %v879 = vsub.f32 %v159, %v867
      %v880 = vsub.f32 %v160, %v871
      %v881 = vmin.f32 %v873, 0.0
      %v882 = vmin.f32 %v874, 0.0
      %v883 = vmin.f32 %v875, 0.0
      %v884 = vmin.f32 %v876, 0.0
      %v885 = vmin.f32 %v877, 0.0
      %v886 = vmin.f32 %v878, 0.0
      %v887 = vmin.f32 %v879, 0.0
      %v888 = vmin.f32 %v880, 0.0
      %v889 = vadd.f32 %v833, %v881
      %v890 = vadd.f32 %v834, %v882
      %v891 = vadd.f32 %v835, %v883
      %v892 = vadd.f32 %v836, %v884
      %v893 = vadd.f32 %v837, %v885
      %v894 = vadd.f32 %v838, %v886
      %v895 = vadd.f32 %v839, %v887
      %v896 = vadd.f32 %v840, %v888
      %897 = vset.pattern.permute.xlu0 13
      %898 = vperm.xlu0 %897, %v153
      %v899 = vpop.permute.xlu0 %898
      %901 = vset.pattern.permute.xlu0 13
      %902 = vperm.xlu0 %901, %v154
      %v903 = vpop.permute.xlu0 %902
      %905 = vset.pattern.permute.xlu0 13
      %906 = vperm.xlu0 %905, %v155
      %v907 = vpop.permute.xlu0 %906
      %909 = vset.pattern.permute.xlu0 13
      %910 = vperm.xlu0 %909, %v156
      %v911 = vpop.permute.xlu0 %910
      %913 = vset.pattern.permute.xlu0 13
      %914 = vperm.xlu0 %913, %v157
      %v915 = vpop.permute.xlu0 %914
      %917 = vset.pattern.permute.xlu0 13
      %918 = vperm.xlu0 %917, %v158
      %v919 = vpop.permute.xlu0 %918
      %921 = vset.pattern.permute.xlu0 13
      %922 = vperm.xlu0 %921, %v159
      %v923 = vpop.permute.xlu0 %922
      %925 = vset.pattern.permute.xlu0 13
      %926 = vperm.xlu0 %925, %v160
      %v927 = vpop.permute.xlu0 %926
      %v929 = vsub.f32 %v153, %v899
      %v930 = vsub.f32 %v154, %v903
      %v931 = vsub.f32 %v155, %v907
      %v932 = vsub.f32 %v156, %v911
      %v933 = vsub.f32 %v157, %v915
      %v934 = vsub.f32 %v158, %v919
      %v935 = vsub.f32 %v159, %v923
      %v936 = vsub.f32 %v160, %v927
      %v937 = vmin.f32 %v929, 0.0
      %v938 = vmin.f32 %v930, 0.0
      %v939 = vmin.f32 %v931, 0.0
      %v940 = vmin.f32 %v932, 0.0
      %v941 = vmin.f32 %v933, 0.0
      %v942 = vmin.f32 %v934, 0.0
      %v943 = vmin.f32 %v935, 0.0
      %v944 = vmin.f32 %v936, 0.0
      %v945 = vadd.f32 %v889, %v937
      %v946 = vadd.f32 %v890, %v938
      %v947 = vadd.f32 %v891, %v939
      %v948 = vadd.f32 %v892, %v940
      %v949 = vadd.f32 %v893, %v941
      %v950 = vadd.f32 %v894, %v942
      %v951 = vadd.f32 %v895, %v943
      %v952 = vadd.f32 %v896, %v944
      %953 = vset.pattern.permute.xlu0 14
      %954 = vperm.xlu0 %953, %v153
      %v955 = vpop.permute.xlu0 %954
      %957 = vset.pattern.permute.xlu0 14
      %958 = vperm.xlu0 %957, %v154
      %v959 = vpop.permute.xlu0 %958
      %961 = vset.pattern.permute.xlu0 14
      %962 = vperm.xlu0 %961, %v155
      %v963 = vpop.permute.xlu0 %962
      %965 = vset.pattern.permute.xlu0 14
      %966 = vperm.xlu0 %965, %v156
      %v967 = vpop.permute.xlu0 %966
      %969 = vset.pattern.permute.xlu0 14
      %970 = vperm.xlu0 %969, %v157
      %v971 = vpop.permute.xlu0 %970
      %973 = vset.pattern.permute.xlu0 14
      %974 = vperm.xlu0 %973, %v158
      %v975 = vpop.permute.xlu0 %974
      %977 = vset.pattern.permute.xlu0 14
      %978 = vperm.xlu0 %977, %v159
      %v979 = vpop.permute.xlu0 %978
      %981 = vset.pattern.permute.xlu0 14
      %982 = vperm.xlu0 %981, %v160
      %v983 = vpop.permute.xlu0 %982
      %v985 = vsub.f32 %v153, %v955
      %v986 = vsub.f32 %v154, %v959
      %v987 = vsub.f32 %v155, %v963
      %v988 = vsub.f32 %v156, %v967
      %v989 = vsub.f32 %v157, %v971
      %v990 = vsub.f32 %v158, %v975
      %v991 = vsub.f32 %v159, %v979
      %v992 = vsub.f32 %v160, %v983
      %v993 = vmin.f32 %v985, 0.0
      %v994 = vmin.f32 %v986, 0.0
      %v995 = vmin.f32 %v987, 0.0
      %v996 = vmin.f32 %v988, 0.0
      %v997 = vmin.f32 %v989, 0.0
      %v998 = vmin.f32 %v990, 0.0
      %v999 = vmin.f32 %v991, 0.0
      %v1000 = vmin.f32 %v992, 0.0
      %v1001 = vadd.f32 %v945, %v993
      %v1002 = vadd.f32 %v946, %v994
      %v1003 = vadd.f32 %v947, %v995
      %v1004 = vadd.f32 %v948, %v996
      %v1005 = vadd.f32 %v949, %v997
      %v1006 = vadd.f32 %v950, %v998
      %v1007 = vadd.f32 %v951, %v999
      %v1008 = vadd.f32 %v952, %v1000
      %1009 = vset.pattern.permute.xlu0 15
      %1010 = vperm.xlu0 %1009, %v153
      %v1011 = vpop.permute.xlu0 %1010
      %1013 = vset.pattern.permute.xlu0 15
      %1014 = vperm.xlu0 %1013, %v154
      %v1015 = vpop.permute.xlu0 %1014
      %1017 = vset.pattern.permute.xlu0 15
      %1018 = vperm.xlu0 %1017, %v155
      %v1019 = vpop.permute.xlu0 %1018
      %1021 = vset.pattern.permute.xlu0 15
      %1022 = vperm.xlu0 %1021, %v156
      %v1023 = vpop.permute.xlu0 %1022
      %1025 = vset.pattern.permute.xlu0 15
      %1026 = vperm.xlu0 %1025, %v157
      %v1027 = vpop.permute.xlu0 %1026
      %1029 = vset.pattern.permute.xlu0 15
      %1030 = vperm.xlu0 %1029, %v158
      %v1031 = vpop.permute.xlu0 %1030
      %1033 = vset.pattern.permute.xlu0 15
      %1034 = vperm.xlu0 %1033, %v159
      %v1035 = vpop.permute.xlu0 %1034
      %1037 = vset.pattern.permute.xlu0 15
      %1038 = vperm.xlu0 %1037, %v160
      %v1039 = vpop.permute.xlu0 %1038
      %v1041 = vsub.f32 %v153, %v1011
      %v1042 = vsub.f32 %v154, %v1015
      %v1043 = vsub.f32 %v155, %v1019
      %v1044 = vsub.f32 %v156, %v1023
      %v1045 = vsub.f32 %v157, %v1027
      %v1046 = vsub.f32 %v158, %v1031
      %v1047 = vsub.f32 %v159, %v1035
      %v1048 = vsub.f32 %v160, %v1039
      %v1049 = vmin.f32 %v1041, 0.0
      %v1050 = vmin.f32 %v1042, 0.0
      %v1051 = vmin.f32 %v1043, 0.0
      %v1052 = vmin.f32 %v1044, 0.0
      %v1053 = vmin.f32 %v1045, 0.0
      %v1054 = vmin.f32 %v1046, 0.0
      %v1055 = vmin.f32 %v1047, 0.0
      %v1056 = vmin.f32 %v1048, 0.0
      %v1057 = vadd.f32 %v1001, %v1049
      %v1058 = vadd.f32 %v1002, %v1050
      %v1059 = vadd.f32 %v1003, %v1051
      %v1060 = vadd.f32 %v1004, %v1052
      %v1061 = vadd.f32 %v1005, %v1053
      %v1062 = vadd.f32 %v1006, %v1054
      %v1063 = vadd.f32 %v1007, %v1055
      %v1064 = vadd.f32 %v1008, %v1056
      %1065 = vset.pattern.permute.xlu0 16
      %1066 = vperm.xlu0 %1065, %v153
      %v1067 = vpop.permute.xlu0 %1066
      %1069 = vset.pattern.permute.xlu0 16
      %1070 = vperm.xlu0 %1069, %v154
      %v1071 = vpop.permute.xlu0 %1070
      %1073 = vset.pattern.permute.xlu0 16
      %1074 = vperm.xlu0 %1073, %v155
      %v1075 = vpop.permute.xlu0 %1074
      %1077 = vset.pattern.permute.xlu0 16
      %1078 = vperm.xlu0 %1077, %v156
      %v1079 = vpop.permute.xlu0 %1078
      %1081 = vset.pattern.permute.xlu0 16
      %1082 = vperm.xlu0 %1081, %v157
      %v1083 = vpop.permute.xlu0 %1082
      %1085 = vset.pattern.permute.xlu0 16
      %1086 = vperm.xlu0 %1085, %v158
      %v1087 = vpop.permute.xlu0 %1086
      %1089 = vset.pattern.permute.xlu0 16
      %1090 = vperm.xlu0 %1089, %v159
      %v1091 = vpop.permute.xlu0 %1090
      %1093 = vset.pattern.permute.xlu0 16
      %1094 = vperm.xlu0 %1093, %v160
      %v1095 = vpop.permute.xlu0 %1094
      %v1097 = vsub.f32 %v153, %v1067
      %v1098 = vsub.f32 %v154, %v1071
      %v1099 = vsub.f32 %v155, %v1075
      %v1100 = vsub.f32 %v156, %v1079
      %v1101 = vsub.f32 %v157, %v1083
      %v1102 = vsub.f32 %v158, %v1087
      %v1103 = vsub.f32 %v159, %v1091
      %v1104 = vsub.f32 %v160, %v1095
      %v1105 = vmin.f32 %v1097, 0.0
      %v1106 = vmin.f32 %v1098, 0.0
      %v1107 = vmin.f32 %v1099, 0.0
      %v1108 = vmin.f32 %v1100, 0.0
      %v1109 = vmin.f32 %v1101, 0.0
      %v1110 = vmin.f32 %v1102, 0.0
      %v1111 = vmin.f32 %v1103, 0.0
      %v1112 = vmin.f32 %v1104, 0.0
      %v1113 = vadd.f32 %v1057, %v1105
      %v1114 = vadd.f32 %v1058, %v1106
      %v1115 = vadd.f32 %v1059, %v1107
      %v1116 = vadd.f32 %v1060, %v1108
      %v1117 = vadd.f32 %v1061, %v1109
      %v1118 = vadd.f32 %v1062, %v1110
      %v1119 = vadd.f32 %v1063, %v1111
      %v1120 = vadd.f32 %v1064, %v1112
      %1121 = vset.pattern.permute.xlu0 17
      %1122 = vperm.xlu0 %1121, %v153
      %v1123 = vpop.permute.xlu0 %1122
      %1125 = vset.pattern.permute.xlu0 17
      %1126 = vperm.xlu0 %1125, %v154
      %v1127 = vpop.permute.xlu0 %1126
      %1129 = vset.pattern.permute.xlu0 17
      %1130 = vperm.xlu0 %1129, %v155
      %v1131 = vpop.permute.xlu0 %1130
      %1133 = vset.pattern.permute.xlu0 17
      %1134 = vperm.xlu0 %1133, %v156
      %v1135 = vpop.permute.xlu0 %1134
      %1137 = vset.pattern.permute.xlu0 17
      %1138 = vperm.xlu0 %1137, %v157
      %v1139 = vpop.permute.xlu0 %1138
      %1141 = vset.pattern.permute.xlu0 17
      %1142 = vperm.xlu0 %1141, %v158
      %v1143 = vpop.permute.xlu0 %1142
      %1145 = vset.pattern.permute.xlu0 17
      %1146 = vperm.xlu0 %1145, %v159
      %v1147 = vpop.permute.xlu0 %1146
      %1149 = vset.pattern.permute.xlu0 17
      %1150 = vperm.xlu0 %1149, %v160
      %v1151 = vpop.permute.xlu0 %1150
      %v1153 = vsub.f32 %v153, %v1123
      %v1154 = vsub.f32 %v154, %v1127
      %v1155 = vsub.f32 %v155, %v1131
      %v1156 = vsub.f32 %v156, %v1135
      %v1157 = vsub.f32 %v157, %v1139
      %v1158 = vsub.f32 %v158, %v1143
      %v1159 = vsub.f32 %v159, %v1147
      %v1160 = vsub.f32 %v160, %v1151
      %v1161 = vmin.f32 %v1153, 0.0
      %v1162 = vmin.f32 %v1154, 0.0
      %v1163 = vmin.f32 %v1155, 0.0
      %v1164 = vmin.f32 %v1156, 0.0
      %v1165 = vmin.f32 %v1157, 0.0
      %v1166 = vmin.f32 %v1158, 0.0
      %v1167 = vmin.f32 %v1159, 0.0
      %v1168 = vmin.f32 %v1160, 0.0
      %v1169 = vadd.f32 %v1113, %v1161
      %v1170 = vadd.f32 %v1114, %v1162
      %v1171 = vadd.f32 %v1115, %v1163
      %v1172 = vadd.f32 %v1116, %v1164
      %v1173 = vadd.f32 %v1117, %v1165
      %v1174 = vadd.f32 %v1118, %v1166
      %v1175 = vadd.f32 %v1119, %v1167
      %v1176 = vadd.f32 %v1120, %v1168
      %1177 = vset.pattern.permute.xlu0 18
      %1178 = vperm.xlu0 %1177, %v153
      %v1179 = vpop.permute.xlu0 %1178
      %1181 = vset.pattern.permute.xlu0 18
      %1182 = vperm.xlu0 %1181, %v154
      %v1183 = vpop.permute.xlu0 %1182
      %1185 = vset.pattern.permute.xlu0 18
      %1186 = vperm.xlu0 %1185, %v155
      %v1187 = vpop.permute.xlu0 %1186
      %1189 = vset.pattern.permute.xlu0 18
      %1190 = vperm.xlu0 %1189, %v156
      %v1191 = vpop.permute.xlu0 %1190
      %1193 = vset.pattern.permute.xlu0 18
      %1194 = vperm.xlu0 %1193, %v157
      %v1195 = vpop.permute.xlu0 %1194
      %1197 = vset.pattern.permute.xlu0 18
      %1198 = vperm.xlu0 %1197, %v158
      %v1199 = vpop.permute.xlu0 %1198
      %1201 = vset.pattern.permute.xlu0 18
      %1202 = vperm.xlu0 %1201, %v159
      %v1203 = vpop.permute.xlu0 %1202
      %1205 = vset.pattern.permute.xlu0 18
      %1206 = vperm.xlu0 %1205, %v160
      %v1207 = vpop.permute.xlu0 %1206
      %v1209 = vsub.f32 %v153, %v1179
      %v1210 = vsub.f32 %v154, %v1183
      %v1211 = vsub.f32 %v155, %v1187
      %v1212 = vsub.f32 %v156, %v1191
      %v1213 = vsub.f32 %v157, %v1195
      %v1214 = vsub.f32 %v158, %v1199
      %v1215 = vsub.f32 %v159, %v1203
      %v1216 = vsub.f32 %v160, %v1207
      %v1217 = vmin.f32 %v1209, 0.0
      %v1218 = vmin.f32 %v1210, 0.0
      %v1219 = vmin.f32 %v1211, 0.0
      %v1220 = vmin.f32 %v1212, 0.0
      %v1221 = vmin.f32 %v1213, 0.0
      %v1222 = vmin.f32 %v1214, 0.0
      %v1223 = vmin.f32 %v1215, 0.0
      %v1224 = vmin.f32 %v1216, 0.0
      %v1225 = vadd.f32 %v1169, %v1217
      %v1226 = vadd.f32 %v1170, %v1218
      %v1227 = vadd.f32 %v1171, %v1219
      %v1228 = vadd.f32 %v1172, %v1220
      %v1229 = vadd.f32 %v1173, %v1221
      %v1230 = vadd.f32 %v1174, %v1222
      %v1231 = vadd.f32 %v1175, %v1223
      %v1232 = vadd.f32 %v1176, %v1224
      %1233 = vset.pattern.permute.xlu0 19
      %1234 = vperm.xlu0 %1233, %v153
      %v1235 = vpop.permute.xlu0 %1234
      %1237 = vset.pattern.permute.xlu0 19
      %1238 = vperm.xlu0 %1237, %v154
      %v1239 = vpop.permute.xlu0 %1238
      %1241 = vset.pattern.permute.xlu0 19
      %1242 = vperm.xlu0 %1241, %v155
      %v1243 = vpop.permute.xlu0 %1242
      %1245 = vset.pattern.permute.xlu0 19
      %1246 = vperm.xlu0 %1245, %v156
      %v1247 = vpop.permute.xlu0 %1246
      %1249 = vset.pattern.permute.xlu0 19
      %1250 = vperm.xlu0 %1249, %v157
      %v1251 = vpop.permute.xlu0 %1250
      %1253 = vset.pattern.permute.xlu0 19
      %1254 = vperm.xlu0 %1253, %v158
      %v1255 = vpop.permute.xlu0 %1254
      %1257 = vset.pattern.permute.xlu0 19
      %1258 = vperm.xlu0 %1257, %v159
      %v1259 = vpop.permute.xlu0 %1258
      %1261 = vset.pattern.permute.xlu0 19
      %1262 = vperm.xlu0 %1261, %v160
      %v1263 = vpop.permute.xlu0 %1262
      %v1265 = vsub.f32 %v153, %v1235
      %v1266 = vsub.f32 %v154, %v1239
      %v1267 = vsub.f32 %v155, %v1243
      %v1268 = vsub.f32 %v156, %v1247
      %v1269 = vsub.f32 %v157, %v1251
      %v1270 = vsub.f32 %v158, %v1255
      %v1271 = vsub.f32 %v159, %v1259
      %v1272 = vsub.f32 %v160, %v1263
      %v1273 = vmin.f32 %v1265, 0.0
      %v1274 = vmin.f32 %v1266, 0.0
      %v1275 = vmin.f32 %v1267, 0.0
      %v1276 = vmin.f32 %v1268, 0.0
      %v1277 = vmin.f32 %v1269, 0.0
      %v1278 = vmin.f32 %v1270, 0.0
      %v1279 = vmin.f32 %v1271, 0.0
      %v1280 = vmin.f32 %v1272, 0.0
      %v1281 = vadd.f32 %v1225, %v1273
      %v1282 = vadd.f32 %v1226, %v1274
      %v1283 = vadd.f32 %v1227, %v1275
      %v1284 = vadd.f32 %v1228, %v1276
      %v1285 = vadd.f32 %v1229, %v1277
      %v1286 = vadd.f32 %v1230, %v1278
      %v1287 = vadd.f32 %v1231, %v1279
      %v1288 = vadd.f32 %v1232, %v1280
      %1289 = vset.pattern.permute.xlu0 20
      %1290 = vperm.xlu0 %1289, %v153
      %v1291 = vpop.permute.xlu0 %1290
      %1293 = vset.pattern.permute.xlu0 20
      %1294 = vperm.xlu0 %1293, %v154
      %v1295 = vpop.permute.xlu0 %1294
      %1297 = vset.pattern.permute.xlu0 20
      %1298 = vperm.xlu0 %1297, %v155
      %v1299 = vpop.permute.xlu0 %1298
      %1301 = vset.pattern.permute.xlu0 20
      %1302 = vperm.xlu0 %1301, %v156
      %v1303 = vpop.permute.xlu0 %1302
      %1305 = vset.pattern.permute.xlu0 20
      %1306 = vperm.xlu0 %1305, %v157
      %v1307 = vpop.permute.xlu0 %1306
      %1309 = vset.pattern.permute.xlu0 20
      %1310 = vperm.xlu0 %1309, %v158
      %v1311 = vpop.permute.xlu0 %1310
      %1313 = vset.pattern.permute.xlu0 20
      %1314 = vperm.xlu0 %1313, %v159
      %v1315 = vpop.permute.xlu0 %1314
      %1317 = vset.pattern.permute.xlu0 20
      %1318 = vperm.xlu0 %1317, %v160
      %v1319 = vpop.permute.xlu0 %1318
      %v1321 = vsub.f32 %v153, %v1291
      %v1322 = vsub.f32 %v154, %v1295
      %v1323 = vsub.f32 %v155, %v1299
      %v1324 = vsub.f32 %v156, %v1303
      %v1325 = vsub.f32 %v157, %v1307
      %v1326 = vsub.f32 %v158, %v1311
      %v1327 = vsub.f32 %v159, %v1315
      %v1328 = vsub.f32 %v160, %v1319
      %v1329 = vmin.f32 %v1321, 0.0
      %v1330 = vmin.f32 %v1322, 0.0
      %v1331 = vmin.f32 %v1323, 0.0
      %v1332 = vmin.f32 %v1324, 0.0
      %v1333 = vmin.f32 %v1325, 0.0
      %v1334 = vmin.f32 %v1326, 0.0
      %v1335 = vmin.f32 %v1327, 0.0
      %v1336 = vmin.f32 %v1328, 0.0
      %v1337 = vadd.f32 %v1281, %v1329
      %v1338 = vadd.f32 %v1282, %v1330
      %v1339 = vadd.f32 %v1283, %v1331
      %v1340 = vadd.f32 %v1284, %v1332
      %v1341 = vadd.f32 %v1285, %v1333
      %v1342 = vadd.f32 %v1286, %v1334
      %v1343 = vadd.f32 %v1287, %v1335
      %v1344 = vadd.f32 %v1288, %v1336
      %1345 = vset.pattern.permute.xlu0 21
      %1346 = vperm.xlu0 %1345, %v153
      %v1347 = vpop.permute.xlu0 %1346
      %1349 = vset.pattern.permute.xlu0 21
      %1350 = vperm.xlu0 %1349, %v154
      %v1351 = vpop.permute.xlu0 %1350
      %1353 = vset.pattern.permute.xlu0 21
      %1354 = vperm.xlu0 %1353, %v155
      %v1355 = vpop.permute.xlu0 %1354
      %1357 = vset.pattern.permute.xlu0 21
      %1358 = vperm.xlu0 %1357, %v156
      %v1359 = vpop.permute.xlu0 %1358
      %1361 = vset.pattern.permute.xlu0 21
      %1362 = vperm.xlu0 %1361, %v157
      %v1363 = vpop.permute.xlu0 %1362
      %1365 = vset.pattern.permute.xlu0 21
      %1366 = vperm.xlu0 %1365, %v158
      %v1367 = vpop.permute.xlu0 %1366
      %1369 = vset.pattern.permute.xlu0 21
      %1370 = vperm.xlu0 %1369, %v159
      %v1371 = vpop.permute.xlu0 %1370
      %1373 = vset.pattern.permute.xlu0 21
      %1374 = vperm.xlu0 %1373, %v160
      %v1375 = vpop.permute.xlu0 %1374
      %v1377 = vsub.f32 %v153, %v1347
      %v1378 = vsub.f32 %v154, %v1351
      %v1379 = vsub.f32 %v155, %v1355
      %v1380 = vsub.f32 %v156, %v1359
      %v1381 = vsub.f32 %v157, %v1363
      %v1382 = vsub.f32 %v158, %v1367
      %v1383 = vsub.f32 %v159, %v1371
      %v1384 = vsub.f32 %v160, %v1375
      %v1385 = vmin.f32 %v1377, 0.0
      %v1386 = vmin.f32 %v1378, 0.0
      %v1387 = vmin.f32 %v1379, 0.0
      %v1388 = vmin.f32 %v1380, 0.0
      %v1389 = vmin.f32 %v1381, 0.0
      %v1390 = vmin.f32 %v1382, 0.0
      %v1391 = vmin.f32 %v1383, 0.0
      %v1392 = vmin.f32 %v1384, 0.0
      %v1393 = vadd.f32 %v1337, %v1385
      %v1394 = vadd.f32 %v1338, %v1386
      %v1395 = vadd.f32 %v1339, %v1387
      %v1396 = vadd.f32 %v1340, %v1388
      %v1397 = vadd.f32 %v1341, %v1389
      %v1398 = vadd.f32 %v1342, %v1390
      %v1399 = vadd.f32 %v1343, %v1391
      %v1400 = vadd.f32 %v1344, %v1392
      %1401 = vset.pattern.permute.xlu0 22
      %1402 = vperm.xlu0 %1401, %v153
      %v1403 = vpop.permute.xlu0 %1402
      %1405 = vset.pattern.permute.xlu0 22
      %1406 = vperm.xlu0 %1405, %v154
      %v1407 = vpop.permute.xlu0 %1406
      %1409 = vset.pattern.permute.xlu0 22
      %1410 = vperm.xlu0 %1409, %v155
      %v1411 = vpop.permute.xlu0 %1410
      %1413 = vset.pattern.permute.xlu0 22
      %1414 = vperm.xlu0 %1413, %v156
      %v1415 = vpop.permute.xlu0 %1414
      %1417 = vset.pattern.permute.xlu0 22
      %1418 = vperm.xlu0 %1417, %v157
      %v1419 = vpop.permute.xlu0 %1418
      %1421 = vset.pattern.permute.xlu0 22
      %1422 = vperm.xlu0 %1421, %v158
      %v1423 = vpop.permute.xlu0 %1422
      %1425 = vset.pattern.permute.xlu0 22
      %1426 = vperm.xlu0 %1425, %v159
      %v1427 = vpop.permute.xlu0 %1426
      %1429 = vset.pattern.permute.xlu0 22
      %1430 = vperm.xlu0 %1429, %v160
      %v1431 = vpop.permute.xlu0 %1430
      %v1433 = vsub.f32 %v153, %v1403
      %v1434 = vsub.f32 %v154, %v1407
      %v1435 = vsub.f32 %v155, %v1411
      %v1436 = vsub.f32 %v156, %v1415
      %v1437 = vsub.f32 %v157, %v1419
      %v1438 = vsub.f32 %v158, %v1423
      %v1439 = vsub.f32 %v159, %v1427
      %v1440 = vsub.f32 %v160, %v1431
      %v1441 = vmin.f32 %v1433, 0.0
      %v1442 = vmin.f32 %v1434, 0.0
      %v1443 = vmin.f32 %v1435, 0.0
      %v1444 = vmin.f32 %v1436, 0.0
      %v1445 = vmin.f32 %v1437, 0.0
      %v1446 = vmin.f32 %v1438, 0.0
      %v1447 = vmin.f32 %v1439, 0.0
      %v1448 = vmin.f32 %v1440, 0.0
      %v1449 = vadd.f32 %v1393, %v1441
      %v1450 = vadd.f32 %v1394, %v1442
      %v1451 = vadd.f32 %v1395, %v1443
      %v1452 = vadd.f32 %v1396, %v1444
      %v1453 = vadd.f32 %v1397, %v1445
      %v1454 = vadd.f32 %v1398, %v1446
      %v1455 = vadd.f32 %v1399, %v1447
      %v1456 = vadd.f32 %v1400, %v1448
      %1457 = vset.pattern.permute.xlu0 23
      %1458 = vperm.xlu0 %1457, %v153
      %v1459 = vpop.permute.xlu0 %1458
      %1461 = vset.pattern.permute.xlu0 23
      %1462 = vperm.xlu0 %1461, %v154
      %v1463 = vpop.permute.xlu0 %1462
      %1465 = vset.pattern.permute.xlu0 23
      %1466 = vperm.xlu0 %1465, %v155
      %v1467 = vpop.permute.xlu0 %1466
      %1469 = vset.pattern.permute.xlu0 23
      %1470 = vperm.xlu0 %1469, %v156
      %v1471 = vpop.permute.xlu0 %1470
      %1473 = vset.pattern.permute.xlu0 23
      %1474 = vperm.xlu0 %1473, %v157
      %v1475 = vpop.permute.xlu0 %1474
      %1477 = vset.pattern.permute.xlu0 23
      %1478 = vperm.xlu0 %1477, %v158
      %v1479 = vpop.permute.xlu0 %1478
      %1481 = vset.pattern.permute.xlu0 23
      %1482 = vperm.xlu0 %1481, %v159
      %v1483 = vpop.permute.xlu0 %1482
      %1485 = vset.pattern.permute.xlu0 23
      %1486 = vperm.xlu0 %1485, %v160
      %v1487 = vpop.permute.xlu0 %1486
      %v1489 = vsub.f32 %v153, %v1459
      %v1490 = vsub.f32 %v154, %v1463
      %v1491 = vsub.f32 %v155, %v1467
      %v1492 = vsub.f32 %v156, %v1471
      %v1493 = vsub.f32 %v157, %v1475
      %v1494 = vsub.f32 %v158, %v1479
      %v1495 = vsub.f32 %v159, %v1483
      %v1496 = vsub.f32 %v160, %v1487
      %v1497 = vmin.f32 %v1489, 0.0
      %v1498 = vmin.f32 %v1490, 0.0
      %v1499 = vmin.f32 %v1491, 0.0
      %v1500 = vmin.f32 %v1492, 0.0
      %v1501 = vmin.f32 %v1493, 0.0
      %v1502 = vmin.f32 %v1494, 0.0
      %v1503 = vmin.f32 %v1495, 0.0
      %v1504 = vmin.f32 %v1496, 0.0
      %v1505 = vadd.f32 %v1449, %v1497
      %v1506 = vadd.f32 %v1450, %v1498
      %v1507 = vadd.f32 %v1451, %v1499
      %v1508 = vadd.f32 %v1452, %v1500
      %v1509 = vadd.f32 %v1453, %v1501
      %v1510 = vadd.f32 %v1454, %v1502
      %v1511 = vadd.f32 %v1455, %v1503
      %v1512 = vadd.f32 %v1456, %v1504
      %1513 = vset.pattern.permute.xlu0 24
      %1514 = vperm.xlu0 %1513, %v153
      %v1515 = vpop.permute.xlu0 %1514
      %1517 = vset.pattern.permute.xlu0 24
      %1518 = vperm.xlu0 %1517, %v154
      %v1519 = vpop.permute.xlu0 %1518
      %1521 = vset.pattern.permute.xlu0 24
      %1522 = vperm.xlu0 %1521, %v155
      %v1523 = vpop.permute.xlu0 %1522
      %1525 = vset.pattern.permute.xlu0 24
      %1526 = vperm.xlu0 %1525, %v156
      %v1527 = vpop.permute.xlu0 %1526
      %1529 = vset.pattern.permute.xlu0 24
      %1530 = vperm.xlu0 %1529, %v157
      %v1531 = vpop.permute.xlu0 %1530
      %1533 = vset.pattern.permute.xlu0 24
      %1534 = vperm.xlu0 %1533, %v158
      %v1535 = vpop.permute.xlu0 %1534
      %1537 = vset.pattern.permute.xlu0 24
      %1538 = vperm.xlu0 %1537, %v159
      %v1539 = vpop.permute.xlu0 %1538
      %1541 = vset.pattern.permute.xlu0 24
      %1542 = vperm.xlu0 %1541, %v160
      %v1543 = vpop.permute.xlu0 %1542
      %v1545 = vsub.f32 %v153, %v1515
      %v1546 = vsub.f32 %v154, %v1519
      %v1547 = vsub.f32 %v155, %v1523
      %v1548 = vsub.f32 %v156, %v1527
      %v1549 = vsub.f32 %v157, %v1531
      %v1550 = vsub.f32 %v158, %v1535
      %v1551 = vsub.f32 %v159, %v1539
      %v1552 = vsub.f32 %v160, %v1543
      %v1553 = vmin.f32 %v1545, 0.0
      %v1554 = vmin.f32 %v1546, 0.0
      %v1555 = vmin.f32 %v1547, 0.0
      %v1556 = vmin.f32 %v1548, 0.0
      %v1557 = vmin.f32 %v1549, 0.0
      %v1558 = vmin.f32 %v1550, 0.0
      %v1559 = vmin.f32 %v1551, 0.0
      %v1560 = vmin.f32 %v1552, 0.0
      %v1561 = vadd.f32 %v1505, %v1553
      %v1562 = vadd.f32 %v1506, %v1554
      %v1563 = vadd.f32 %v1507, %v1555
      %v1564 = vadd.f32 %v1508, %v1556
      %v1565 = vadd.f32 %v1509, %v1557
      %v1566 = vadd.f32 %v1510, %v1558
      %v1567 = vadd.f32 %v1511, %v1559
      %v1568 = vadd.f32 %v1512, %v1560
      %1569 = vset.pattern.permute.xlu0 25
      %1570 = vperm.xlu0 %1569, %v153
      %v1571 = vpop.permute.xlu0 %1570
      %1573 = vset.pattern.permute.xlu0 25
      %1574 = vperm.xlu0 %1573, %v154
      %v1575 = vpop.permute.xlu0 %1574
      %1577 = vset.pattern.permute.xlu0 25
      %1578 = vperm.xlu0 %1577, %v155
      %v1579 = vpop.permute.xlu0 %1578
      %1581 = vset.pattern.permute.xlu0 25
      %1582 = vperm.xlu0 %1581, %v156
      %v1583 = vpop.permute.xlu0 %1582
      %1585 = vset.pattern.permute.xlu0 25
      %1586 = vperm.xlu0 %1585, %v157
      %v1587 = vpop.permute.xlu0 %1586
      %1589 = vset.pattern.permute.xlu0 25
      %1590 = vperm.xlu0 %1589, %v158
      %v1591 = vpop.permute.xlu0 %1590
      %1593 = vset.pattern.permute.xlu0 25
      %1594 = vperm.xlu0 %1593, %v159
      %v1595 = vpop.permute.xlu0 %1594
      %1597 = vset.pattern.permute.xlu0 25
      %1598 = vperm.xlu0 %1597, %v160
      %v1599 = vpop.permute.xlu0 %1598
      %v1601 = vsub.f32 %v153, %v1571
      %v1602 = vsub.f32 %v154, %v1575
      %v1603 = vsub.f32 %v155, %v1579
      %v1604 = vsub.f32 %v156, %v1583
      %v1605 = vsub.f32 %v157, %v1587
      %v1606 = vsub.f32 %v158, %v1591
      %v1607 = vsub.f32 %v159, %v1595
      %v1608 = vsub.f32 %v160, %v1599
      %v1609 = vmin.f32 %v1601, 0.0
      %v1610 = vmin.f32 %v1602, 0.0
      %v1611 = vmin.f32 %v1603, 0.0
      %v1612 = vmin.f32 %v1604, 0.0
      %v1613 = vmin.f32 %v1605, 0.0
      %v1614 = vmin.f32 %v1606, 0.0
      %v1615 = vmin.f32 %v1607, 0.0
      %v1616 = vmin.f32 %v1608, 0.0
      %v1617 = vadd.f32 %v1561, %v1609
      %v1618 = vadd.f32 %v1562, %v1610
      %v1619 = vadd.f32 %v1563, %v1611
      %v1620 = vadd.f32 %v1564, %v1612
      %v1621 = vadd.f32 %v1565, %v1613
      %v1622 = vadd.f32 %v1566, %v1614
      %v1623 = vadd.f32 %v1567, %v1615
      %v1624 = vadd.f32 %v1568, %v1616
      %1625 = vset.pattern.permute.xlu0 26
      %1626 = vperm.xlu0 %1625, %v153
      %v1627 = vpop.permute.xlu0 %1626
      %1629 = vset.pattern.permute.xlu0 26
      %1630 = vperm.xlu0 %1629, %v154
      %v1631 = vpop.permute.xlu0 %1630
      %1633 = vset.pattern.permute.xlu0 26
      %1634 = vperm.xlu0 %1633, %v155
      %v1635 = vpop.permute.xlu0 %1634
      %1637 = vset.pattern.permute.xlu0 26
      %1638 = vperm.xlu0 %1637, %v156
      %v1639 = vpop.permute.xlu0 %1638
      %1641 = vset.pattern.permute.xlu0 26
      %1642 = vperm.xlu0 %1641, %v157
      %v1643 = vpop.permute.xlu0 %1642
      %1645 = vset.pattern.permute.xlu0 26
      %1646 = vperm.xlu0 %1645, %v158
      %v1647 = vpop.permute.xlu0 %1646
      %1649 = vset.pattern.permute.xlu0 26
      %1650 = vperm.xlu0 %1649, %v159
      %v1651 = vpop.permute.xlu0 %1650
      %1653 = vset.pattern.permute.xlu0 26
      %1654 = vperm.xlu0 %1653, %v160
      %v1655 = vpop.permute.xlu0 %1654
      %v1657 = vsub.f32 %v153, %v1627
      %v1658 = vsub.f32 %v154, %v1631
      %v1659 = vsub.f32 %v155, %v1635
      %v1660 = vsub.f32 %v156, %v1639
      %v1661 = vsub.f32 %v157, %v1643
      %v1662 = vsub.f32 %v158, %v1647
      %v1663 = vsub.f32 %v159, %v1651
      %v1664 = vsub.f32 %v160, %v1655
      %v1665 = vmin.f32 %v1657, 0.0
      %v1666 = vmin.f32 %v1658, 0.0
      %v1667 = vmin.f32 %v1659, 0.0
      %v1668 = vmin.f32 %v1660, 0.0
      %v1669 = vmin.f32 %v1661, 0.0
      %v1670 = vmin.f32 %v1662, 0.0
      %v1671 = vmin.f32 %v1663, 0.0
      %v1672 = vmin.f32 %v1664, 0.0
      %v1673 = vadd.f32 %v1617, %v1665
      %v1674 = vadd.f32 %v1618, %v1666
      %v1675 = vadd.f32 %v1619, %v1667
      %v1676 = vadd.f32 %v1620, %v1668
      %v1677 = vadd.f32 %v1621, %v1669
      %v1678 = vadd.f32 %v1622, %v1670
      %v1679 = vadd.f32 %v1623, %v1671
      %v1680 = vadd.f32 %v1624, %v1672
      %1681 = vset.pattern.permute.xlu0 27
      %1682 = vperm.xlu0 %1681, %v153
      %v1683 = vpop.permute.xlu0 %1682
      %1685 = vset.pattern.permute.xlu0 27
      %1686 = vperm.xlu0 %1685, %v154
      %v1687 = vpop.permute.xlu0 %1686
      %1689 = vset.pattern.permute.xlu0 27
      %1690 = vperm.xlu0 %1689, %v155
      %v1691 = vpop.permute.xlu0 %1690
      %1693 = vset.pattern.permute.xlu0 27
      %1694 = vperm.xlu0 %1693, %v156
      %v1695 = vpop.permute.xlu0 %1694
      %1697 = vset.pattern.permute.xlu0 27
      %1698 = vperm.xlu0 %1697, %v157
      %v1699 = vpop.permute.xlu0 %1698
      %1701 = vset.pattern.permute.xlu0 27
      %1702 = vperm.xlu0 %1701, %v158
      %v1703 = vpop.permute.xlu0 %1702
      %1705 = vset.pattern.permute.xlu0 27
      %1706 = vperm.xlu0 %1705, %v159
      %v1707 = vpop.permute.xlu0 %1706
      %1709 = vset.pattern.permute.xlu0 27
      %1710 = vperm.xlu0 %1709, %v160
      %v1711 = vpop.permute.xlu0 %1710
      %v1713 = vsub.f32 %v153, %v1683
      %v1714 = vsub.f32 %v154, %v1687
      %v1715 = vsub.f32 %v155, %v1691
      %v1716 = vsub.f32 %v156, %v1695
      %v1717 = vsub.f32 %v157, %v1699
      %v1718 = vsub.f32 %v158, %v1703
      %v1719 = vsub.f32 %v159, %v1707
      %v1720 = vsub.f32 %v160, %v1711
      %v1721 = vmin.f32 %v1713, 0.0
      %v1722 = vmin.f32 %v1714, 0.0
      %v1723 = vmin.f32 %v1715, 0.0
      %v1724 = vmin.f32 %v1716, 0.0
      %v1725 = vmin.f32 %v1717, 0.0
      %v1726 = vmin.f32 %v1718, 0.0
      %v1727 = vmin.f32 %v1719, 0.0
      %v1728 = vmin.f32 %v1720, 0.0
      %v1729 = vadd.f32 %v1673, %v1721
      %v1730 = vadd.f32 %v1674, %v1722
      %v1731 = vadd.f32 %v1675, %v1723
      %v1732 = vadd.f32 %v1676, %v1724
      %v1733 = vadd.f32 %v1677, %v1725
      %v1734 = vadd.f32 %v1678, %v1726
      %v1735 = vadd.f32 %v1679, %v1727
      %v1736 = vadd.f32 %v1680, %v1728
      %1737 = vset.pattern.permute.xlu0 28
      %1738 = vperm.xlu0 %1737, %v153
      %v1739 = vpop.permute.xlu0 %1738
      %1741 = vset.pattern.permute.xlu0 28
      %1742 = vperm.xlu0 %1741, %v154
      %v1743 = vpop.permute.xlu0 %1742
      %1745 = vset.pattern.permute.xlu0 28
      %1746 = vperm.xlu0 %1745, %v155
      %v1747 = vpop.permute.xlu0 %1746
      %1749 = vset.pattern.permute.xlu0 28
      %1750 = vperm.xlu0 %1749, %v156
      %v1751 = vpop.permute.xlu0 %1750
      %1753 = vset.pattern.permute.xlu0 28
      %1754 = vperm.xlu0 %1753, %v157
      %v1755 = vpop.permute.xlu0 %1754
      %1757 = vset.pattern.permute.xlu0 28
      %1758 = vperm.xlu0 %1757, %v158
      %v1759 = vpop.permute.xlu0 %1758
      %1761 = vset.pattern.permute.xlu0 28
      %1762 = vperm.xlu0 %1761, %v159
      %v1763 = vpop.permute.xlu0 %1762
      %1765 = vset.pattern.permute.xlu0 28
      %1766 = vperm.xlu0 %1765, %v160
      %v1767 = vpop.permute.xlu0 %1766
      %v1769 = vsub.f32 %v153, %v1739
      %v1770 = vsub.f32 %v154, %v1743
      %v1771 = vsub.f32 %v155, %v1747
      %v1772 = vsub.f32 %v156, %v1751
      %v1773 = vsub.f32 %v157, %v1755
      %v1774 = vsub.f32 %v158, %v1759
      %v1775 = vsub.f32 %v159, %v1763
      %v1776 = vsub.f32 %v160, %v1767
      %v1777 = vmin.f32 %v1769, 0.0
      %v1778 = vmin.f32 %v1770, 0.0
      %v1779 = vmin.f32 %v1771, 0.0
      %v1780 = vmin.f32 %v1772, 0.0
      %v1781 = vmin.f32 %v1773, 0.0
      %v1782 = vmin.f32 %v1774, 0.0
      %v1783 = vmin.f32 %v1775, 0.0
      %v1784 = vmin.f32 %v1776, 0.0
      %v1785 = vadd.f32 %v1729, %v1777
      %v1786 = vadd.f32 %v1730, %v1778
      %v1787 = vadd.f32 %v1731, %v1779
      %v1788 = vadd.f32 %v1732, %v1780
      %v1789 = vadd.f32 %v1733, %v1781
      %v1790 = vadd.f32 %v1734, %v1782
      %v1791 = vadd.f32 %v1735, %v1783
      %v1792 = vadd.f32 %v1736, %v1784
      %1793 = vset.pattern.permute.xlu0 29
      %1794 = vperm.xlu0 %1793, %v153
      %v1795 = vpop.permute.xlu0 %1794
      %1797 = vset.pattern.permute.xlu0 29
      %1798 = vperm.xlu0 %1797, %v154
      %v1799 = vpop.permute.xlu0 %1798
      %1801 = vset.pattern.permute.xlu0 29
      %1802 = vperm.xlu0 %1801, %v155
      %v1803 = vpop.permute.xlu0 %1802
      %1805 = vset.pattern.permute.xlu0 29
      %1806 = vperm.xlu0 %1805, %v156
      %v1807 = vpop.permute.xlu0 %1806
      %1809 = vset.pattern.permute.xlu0 29
      %1810 = vperm.xlu0 %1809, %v157
      %v1811 = vpop.permute.xlu0 %1810
      %1813 = vset.pattern.permute.xlu0 29
      %1814 = vperm.xlu0 %1813, %v158
      %v1815 = vpop.permute.xlu0 %1814
      %1817 = vset.pattern.permute.xlu0 29
      %1818 = vperm.xlu0 %1817, %v159
      %v1819 = vpop.permute.xlu0 %1818
      %1821 = vset.pattern.permute.xlu0 29
      %1822 = vperm.xlu0 %1821, %v160
      %v1823 = vpop.permute.xlu0 %1822
      %v1825 = vsub.f32 %v153, %v1795
      %v1826 = vsub.f32 %v154, %v1799
      %v1827 = vsub.f32 %v155, %v1803
      %v1828 = vsub.f32 %v156, %v1807
      %v1829 = vsub.f32 %v157, %v1811
      %v1830 = vsub.f32 %v158, %v1815
      %v1831 = vsub.f32 %v159, %v1819
      %v1832 = vsub.f32 %v160, %v1823
      %v1833 = vmin.f32 %v1825, 0.0
      %v1834 = vmin.f32 %v1826, 0.0
      %v1835 = vmin.f32 %v1827, 0.0
      %v1836 = vmin.f32 %v1828, 0.0
      %v1837 = vmin.f32 %v1829, 0.0
      %v1838 = vmin.f32 %v1830, 0.0
      %v1839 = vmin.f32 %v1831, 0.0
      %v1840 = vmin.f32 %v1832, 0.0
      %v1841 = vadd.f32 %v1785, %v1833
      %v1842 = vadd.f32 %v1786, %v1834
      %v1843 = vadd.f32 %v1787, %v1835
      %v1844 = vadd.f32 %v1788, %v1836
      %v1845 = vadd.f32 %v1789, %v1837
      %v1846 = vadd.f32 %v1790, %v1838
      %v1847 = vadd.f32 %v1791, %v1839
      %v1848 = vadd.f32 %v1792, %v1840
      %1849 = vset.pattern.permute.xlu0 30
      %1850 = vperm.xlu0 %1849, %v153
      %v1851 = vpop.permute.xlu0 %1850
      %1853 = vset.pattern.permute.xlu0 30
      %1854 = vperm.xlu0 %1853, %v154
      %v1855 = vpop.permute.xlu0 %1854
      %1857 = vset.pattern.permute.xlu0 30
      %1858 = vperm.xlu0 %1857, %v155
      %v1859 = vpop.permute.xlu0 %1858
      %1861 = vset.pattern.permute.xlu0 30
      %1862 = vperm.xlu0 %1861, %v156
      %v1863 = vpop.permute.xlu0 %1862
      %1865 = vset.pattern.permute.xlu0 30
      %1866 = vperm.xlu0 %1865, %v157
      %v1867 = vpop.permute.xlu0 %1866
      %1869 = vset.pattern.permute.xlu0 30
      %1870 = vperm.xlu0 %1869, %v158
      %v1871 = vpop.permute.xlu0 %1870
      %1873 = vset.pattern.permute.xlu0 30
      %1874 = vperm.xlu0 %1873, %v159
      %v1875 = vpop.permute.xlu0 %1874
      %1877 = vset.pattern.permute.xlu0 30
      %1878 = vperm.xlu0 %1877, %v160
      %v1879 = vpop.permute.xlu0 %1878
      %v1881 = vsub.f32 %v153, %v1851
      %v1882 = vsub.f32 %v154, %v1855
      %v1883 = vsub.f32 %v155, %v1859
      %v1884 = vsub.f32 %v156, %v1863
      %v1885 = vsub.f32 %v157, %v1867
      %v1886 = vsub.f32 %v158, %v1871
      %v1887 = vsub.f32 %v159, %v1875
      %v1888 = vsub.f32 %v160, %v1879
      %v1889 = vmin.f32 %v1881, 0.0
      %v1890 = vmin.f32 %v1882, 0.0
      %v1891 = vmin.f32 %v1883, 0.0
      %v1892 = vmin.f32 %v1884, 0.0
      %v1893 = vmin.f32 %v1885, 0.0
      %v1894 = vmin.f32 %v1886, 0.0
      %v1895 = vmin.f32 %v1887, 0.0
      %v1896 = vmin.f32 %v1888, 0.0
      %v1897 = vadd.f32 %v1841, %v1889
      %v1898 = vadd.f32 %v1842, %v1890
      %v1899 = vadd.f32 %v1843, %v1891
      %v1900 = vadd.f32 %v1844, %v1892
      %v1901 = vadd.f32 %v1845, %v1893
      %v1902 = vadd.f32 %v1846, %v1894
      %v1903 = vadd.f32 %v1847, %v1895
      %v1904 = vadd.f32 %v1848, %v1896
      %1905 = vset.pattern.permute.xlu0 31
      %1906 = vperm.xlu0 %1905, %v153
      %v1907 = vpop.permute.xlu0 %1906
      %1909 = vset.pattern.permute.xlu0 31
      %1910 = vperm.xlu0 %1909, %v154
      %v1911 = vpop.permute.xlu0 %1910
      %1913 = vset.pattern.permute.xlu0 31
      %1914 = vperm.xlu0 %1913, %v155
      %v1915 = vpop.permute.xlu0 %1914
      %1917 = vset.pattern.permute.xlu0 31
      %1918 = vperm.xlu0 %1917, %v156
      %v1919 = vpop.permute.xlu0 %1918
      %1921 = vset.pattern.permute.xlu0 31
      %1922 = vperm.xlu0 %1921, %v157
      %v1923 = vpop.permute.xlu0 %1922
      %1925 = vset.pattern.permute.xlu0 31
      %1926 = vperm.xlu0 %1925, %v158
      %v1927 = vpop.permute.xlu0 %1926
      %1929 = vset.pattern.permute.xlu0 31
      %1930 = vperm.xlu0 %1929, %v159
      %v1931 = vpop.permute.xlu0 %1930
      %1933 = vset.pattern.permute.xlu0 31
      %1934 = vperm.xlu0 %1933, %v160
      %v1935 = vpop.permute.xlu0 %1934
      %v1937 = vsub.f32 %v153, %v1907
      %v1938 = vsub.f32 %v154, %v1911
      %v1939 = vsub.f32 %v155, %v1915
      %v1940 = vsub.f32 %v156, %v1919
      %v1941 = vsub.f32 %v157, %v1923
      %v1942 = vsub.f32 %v158, %v1927
      %v1943 = vsub.f32 %v159, %v1931
      %v1944 = vsub.f32 %v160, %v1935
      %v1945 = vmin.f32 %v1937, 0.0
      %v1946 = vmin.f32 %v1938, 0.0
      %v1947 = vmin.f32 %v1939, 0.0
      %v1948 = vmin.f32 %v1940, 0.0
      %v1949 = vmin.f32 %v1941, 0.0
      %v1950 = vmin.f32 %v1942, 0.0
      %v1951 = vmin.f32 %v1943, 0.0
      %v1952 = vmin.f32 %v1944, 0.0
      %v1953 = vadd.f32 %v1897, %v1945
      %v1954 = vadd.f32 %v1898, %v1946
      %v1955 = vadd.f32 %v1899, %v1947
      %v1956 = vadd.f32 %v1900, %v1948
      %v1957 = vadd.f32 %v1901, %v1949
      %v1958 = vadd.f32 %v1902, %v1950
      %v1959 = vadd.f32 %v1903, %v1951
      %v1960 = vadd.f32 %v1904, %v1952
      %vm1961 = vcmp.gt.f32.partialorder %v1953, -1.0
      %vm1962 = vcmp.gt.f32.partialorder %v1954, -1.0
      %vm1963 = vcmp.gt.f32.partialorder %v1955, -1.0
      %vm1964 = vcmp.gt.f32.partialorder %v1956, -1.0
      %vm1965 = vcmp.gt.f32.partialorder %v1957, -1.0
      %vm1966 = vcmp.gt.f32.partialorder %v1958, -1.0
      %vm1967 = vcmp.gt.f32.partialorder %v1959, -1.0
      %vm1968 = vcmp.gt.f32.partialorder %v1960, -1.0
      %v1969 = vsel %vm1961, 1.0, 0.0
      %v1970 = vsel %vm1962, 1.0, 0.0
      %v1971 = vsel %vm1963, 1.0, 0.0
      %v1972 = vsel %vm1964, 1.0, 0.0
      %v1973 = vsel %vm1965, 1.0, 0.0
      %v1974 = vsel %vm1966, 1.0, 0.0
      %v1975 = vsel %vm1967, 1.0, 0.0
      %v1976 = vsel %vm1968, 1.0, 0.0
      %v1977 = vsel %vm128, %v1969, 0.0
      %1978 = vadd.xlane.f32.xlu0 %v1977
      %v1979 = vpop.xlane.xlu0 %1978
      %v1980 = vsel %vm128, %v1970, 0.0
      %1981 = vadd.xlane.f32.xlu0 %v1980
      %v1982 = vpop.xlane.xlu0 %1981
      %v1983 = vsel %vm128, %v1971, 0.0
      %1984 = vadd.xlane.f32.xlu0 %v1983
      %v1985 = vpop.xlane.xlu0 %1984
      %v1986 = vsel %vm128, %v1972, 0.0
      %1987 = vadd.xlane.f32.xlu0 %v1986
      %v1988 = vpop.xlane.xlu0 %1987
      %v1989 = vsel %vm128, %v1973, 0.0
      %1990 = vadd.xlane.f32.xlu0 %v1989
      %v1991 = vpop.xlane.xlu0 %1990
      %v1992 = vsel %vm128, %v1974, 0.0
      %1993 = vadd.xlane.f32.xlu0 %v1992
      %v1994 = vpop.xlane.xlu0 %1993
      %v1995 = vsel %vm128, %v1975, 0.0
      %1996 = vadd.xlane.f32.xlu0 %v1995
      %v1997 = vpop.xlane.xlu0 %1996
      %v1998 = vsel %vm128, %v1976, 0.0
      %1999 = vadd.xlane.f32.xlu0 %v1998
      %v2000 = vpop.xlane.xlu0 %1999
      %v2001 = vsel %vm1961, %v153, 0.0
      %v2002 = vsel %vm1962, %v154, 0.0
      %v2003 = vsel %vm1963, %v155, 0.0
      %v2004 = vsel %vm1964, %v156, 0.0
      %v2005 = vsel %vm1965, %v157, 0.0
      %v2006 = vsel %vm1966, %v158, 0.0
      %v2007 = vsel %vm1967, %v159, 0.0
      %v2008 = vsel %vm1968, %v160, 0.0
      %v2009 = vsel %vm128, %v2001, 0.0
      %2010 = vadd.xlane.f32.xlu0 %v2009
      %v2011 = vpop.xlane.xlu0 %2010
      %v2012 = vsel %vm128, %v2002, 0.0
      %2013 = vadd.xlane.f32.xlu0 %v2012
      %v2014 = vpop.xlane.xlu0 %2013
      %v2015 = vsel %vm128, %v2003, 0.0
      %2016 = vadd.xlane.f32.xlu0 %v2015
      %v2017 = vpop.xlane.xlu0 %2016
      %v2018 = vsel %vm128, %v2004, 0.0
      %2019 = vadd.xlane.f32.xlu0 %v2018
      %v2020 = vpop.xlane.xlu0 %2019
      %v2021 = vsel %vm128, %v2005, 0.0
      %2022 = vadd.xlane.f32.xlu0 %v2021
      %v2023 = vpop.xlane.xlu0 %2022
      %v2024 = vsel %vm128, %v2006, 0.0
      %2025 = vadd.xlane.f32.xlu0 %v2024
      %v2026 = vpop.xlane.xlu0 %2025
      %v2027 = vsel %vm128, %v2007, 0.0
      %2028 = vadd.xlane.f32.xlu0 %v2027
      %v2029 = vpop.xlane.xlu0 %2028
      %v2030 = vsel %vm128, %v2008, 0.0
      %2031 = vadd.xlane.f32.xlu0 %v2030
      %v2032 = vpop.xlane.xlu0 %2031
      %v2033 = vsub.f32 %v2011, 1.0
      %v2034 = vsub.f32 %v2014, 1.0
      %v2035 = vsub.f32 %v2017, 1.0
      %v2036 = vsub.f32 %v2020, 1.0
      %v2037 = vsub.f32 %v2023, 1.0
      %v2038 = vsub.f32 %v2026, 1.0
      %v2039 = vsub.f32 %v2029, 1.0
      %v2040 = vsub.f32 %v2032, 1.0
      %v2041 = vrcp.pop %v1979
      %v2042 = vmul.f32 %v2033, %v2041
      %v2043 = vrcp.pop %v1982
      %v2044 = vmul.f32 %v2034, %v2043
      %v2045 = vrcp.pop %v1985
      %v2046 = vmul.f32 %v2035, %v2045
      %v2047 = vrcp.pop %v1988
      %v2048 = vmul.f32 %v2036, %v2047
      %v2049 = vrcp.pop %v1991
      %v2050 = vmul.f32 %v2037, %v2049
      %v2051 = vrcp.pop %v1994
      %v2052 = vmul.f32 %v2038, %v2051
      %v2053 = vrcp.pop %v1997
      %v2054 = vmul.f32 %v2039, %v2053
      %v2055 = vrcp.pop %v2000
      %v2056 = vmul.f32 %v2040, %v2055
      %v2057 = vsub.f32 %v153, %v2042
      %v2058 = vsub.f32 %v154, %v2044
      %v2059 = vsub.f32 %v155, %v2046
      %v2060 = vsub.f32 %v156, %v2048
      %v2061 = vsub.f32 %v157, %v2050
      %v2062 = vsub.f32 %v158, %v2052
      %v2063 = vsub.f32 %v159, %v2054
      %v2064 = vsub.f32 %v160, %v2056
      %v2065 = vmax.f32 %v2057, 0.0
      %v2066 = vmax.f32 %v2058, 0.0
      %v2067 = vmax.f32 %v2059, 0.0
      %v2068 = vmax.f32 %v2060, 0.0
      %v2069 = vmax.f32 %v2061, 0.0
      %v2070 = vmax.f32 %v2062, 0.0
      %v2071 = vmax.f32 %v2063, 0.0
      %v2072 = vmax.f32 %v2064, 0.0
      %2073 = vst.msk [vmem:[%s118] sm:$0xff] %vm128, %v2065
      %2074 = vst.msk [vmem:[%s118 + $0x8] sm:$0xff] %vm128, %v2066
      %2075 = vst.msk [vmem:[%s118 + $0x10] sm:$0xff] %vm128, %v2067
      %2076 = vst.msk [vmem:[%s118 + $0x18] sm:$0xff] %vm128, %v2068
      %2077 = vst.msk [vmem:[%s118 + $0x20] sm:$0xff] %vm128, %v2069
      %2078 = vst.msk [vmem:[%s118 + $0x28] sm:$0xff] %vm128, %v2070
      %2079 = vst.msk [vmem:[%s118 + $0x30] sm:$0xff] %vm128, %v2071
      %2080 = vst.msk [vmem:[%s118 + $0x38] sm:$0xff] %vm128, %v2072
      %s2081 = smul.u32 8, %s12
      %p2082 = scmp.lt.s32.totalorder %s2081, 15
      %s2083 = scalar_select %p2082, %s2081, 15
      %s2084 = smul.addr %s2083, 8
      %s2085 = scalar_lea.vmem %s1, %s2084
      // Predicated region
      $region25: #{_sparsemax_2d.1} parent=23 // pred_check
        %p2086 = pneg %p56
      $region26: #{_sparsemax_2d.1} parent=23 // pred_check_branch
        %2088 = sbr.rel (%p2086) target = $region28
      $region27: #{_sparsemax_2d.1} parent=23 // pred_region
        %s2089 = smul.u32 8, %s12
      $region28: #{_sparsemax_2d.1} parent=23 // pred_fallthru
        _
    $region24: #{_sparsemax_2d.1} parent=5 // pred_fallthru
      _
    %p2090 = scmp.le.s32.totalorder 2, %s7
    // Predicated region
    $region29: #{_sparsemax_2d.1} parent=5 // pred_check
      %p2091 = pneg %p2090
    $region30: #{_sparsemax_2d.1} parent=5 // pred_check_branch
      %2093 = sbr.rel (%p2091) target = $region32
    $region31: #{_sparsemax_2d.1} parent=5 // pred_region
      %s2094 = ssub.s32 %s7, 2
      // Predicated region
      $region33: #{_sparsemax_2d.1} parent=31 // pred_check
        %p2095 = pneg %p62
      $region34: #{_sparsemax_2d.1} parent=31 // pred_check_branch
        %2097 = sbr.rel (%p2095) target = $region36
      $region35: #{_sparsemax_2d.1} parent=31 // pred_region
        %s2098 = smul.u32 8, %s13
        %p2099 = scmp.lt.s32.totalorder %s2098, 15
        %s2100 = scalar_select %p2099, %s2098, 15
        %s2101 = smul.addr %s2100, 8
        %s2102 = scalar_lea.vmem %s1, %s2101
      $region36: #{_sparsemax_2d.1} parent=31 // pred_fallthru
        _
    $region32: #{_sparsemax_2d.1} parent=5 // pred_fallthru
      _
  $region6: #{_sparsemax_2d.1} parent=0 // loop_footer
    %s11 = sadd.s32 1, %s7
  $region7: #{_sparsemax_2d.1} parent=0 // loop_footer_branch
    %6 = sbr.rel target = $region3
  $region8: #{_sparsemax_2d.1} parent=0 // loop_exit
    _

</llo_original>
